<compile_context>
chip_gen: v7x
topology: tpu7x:2x2x1
jax: 0.10.0
libtpu: 0.0.40
codegen_flags: <defaults>
</compile_context>

<pallas_src>
import functools

import jax
import jax.numpy as jnp
from jax.experimental import pallas as pl
from jax.experimental.pallas import tpu as pltpu


def _round_up(x, m):
    return ((x + m - 1) // m) * m


def _decoder_fused_kernel(x_ref, wih_ref, whh_ref, b_ref, wout_ref, bout_ref,
                          o_ref, gx_ref, hall_ref, *, T, Bp, Hp):
    """Fused: batched input projection -> LSTM recurrence -> batched output projection.

    x_ref    : (T*Bp, Ep)   bf16  time-major inputs, batch padded to Bp
    wih_ref  : (Ep, 4*Hp)   bf16  input->gates weights  (transposed, gate-padded)
    whh_ref  : (Hp, 4*Hp)   bf16  hidden->gates weights (transposed, gate-padded)
    b_ref    : (1, 4*Hp)    f32   combined bias (b_ih + b_hh), gate-padded
    wout_ref : (Hp, Vp)     bf16  output projection weights (transposed, padded)
    bout_ref : (1, Vp)      f32   output projection bias (padded)
    o_ref    : (T*Bp, Vp)   f32   logits, time-major, lane-dense (Vp % 128 == 0)
    gx_ref   : (T*Bp, 4*Hp) f32   scratch: precomputed x @ W_ih^T + bias
    hall_ref : (T*Bp, Hp)   f32   scratch: all hidden states
    """
    # ---- (1) batched input projection: one big MXU matmul over all T*Bp rows ----
    gx_ref[...] = (jnp.dot(x_ref[...], wih_ref[...],
                           preferred_element_type=jnp.float32) + b_ref[...])

    # ---- (2) sequential LSTM recurrence; only h @ W_hh^T per step on the MXU ----
    whh = whh_ref[...]
    h = jnp.zeros((Bp, Hp), jnp.float32)
    c = jnp.zeros((Bp, Hp), jnp.float32)
    # T is a small static trip count -> fully unrolled, static (sublane-aligned) slices.
    for t in range(T):
        gx = gx_ref[pl.ds(t * Bp, Bp), :]                      # (Bp, 4Hp) f32
        gates = gx + jnp.dot(h.astype(whh.dtype), whh,
                             preferred_element_type=jnp.float32)
        # Gate slices land on 128-lane boundaries (Hp is a multiple of 128).
        i_g = jax.nn.sigmoid(gates[:, 0 * Hp:1 * Hp])
        f_g = jax.nn.sigmoid(gates[:, 1 * Hp:2 * Hp])
        g_g = jnp.tanh(gates[:, 2 * Hp:3 * Hp])
        o_g = jax.nn.sigmoid(gates[:, 3 * Hp:4 * Hp])
        c = f_g * c + i_g * g_g
        h = o_g * jnp.tanh(c)
        hall_ref[pl.ds(t * Bp, Bp), :] = h

    # ---- (3) batched output projection: one big MXU matmul over all T*Bp rows ----
    logits = (jnp.dot(hall_ref[...].astype(wout_ref.dtype), wout_ref[...],
                      preferred_element_type=jnp.float32) + bout_ref[...])
    o_ref[...] = logits.astype(o_ref.dtype)


def decoder_rnn_forward(params, features, captions):
    """Pallas implementation of DecoderRNN.forward.

    features : (B, E) float32
    captions : (B, Tc) int32
    returns  : (B, Tc, V) float32   (time length = 1 + (Tc - 1), as in torch)
    """
    embed_w = params["embed_w"]           # (V, E)
    w_ih = params["w_ih"]                 # (4H, E)
    w_hh = params["w_hh"]                 # (4H, H)
    b_ih = params["b_ih"]                 # (4H,)
    b_hh = params["b_hh"]                 # (4H,)
    w_out = params["w_out"]               # (V, H)
    b_out = params["b_out"]               # (V,)

    B, E = features.shape
    H = w_hh.shape[1]
    V = w_out.shape[0]
    T = captions.shape[1]                 # 1 (features) + (Tc - 1) embedded tokens

    # Lane/sublane-friendly padded sizes.
    Bp = _round_up(max(B, 8), 8)          # f32 sublane multiple
    Ep = _round_up(E, 128)
    Hp = _round_up(H, 128)
    Vp = _round_up(V, 128)

    # ---- glue: embedding gather + features as timestep 0 ----
    # TODO(synk): the embedding gather could be fused via scalar-prefetch + pl.Element
    # row gather; at E=32 the win is modest so it stays as XLA glue.
    caps = captions[:, :-1]                                    # (B, Tc-1)
    embeds = jnp.take(embed_w, caps, axis=0)                   # (B, Tc-1, E)
    inp = jnp.concatenate([features[:, None, :], embeds], 1)   # (B, T, E)

    # Pad batch + embed dims, go time-major, fold time into the matmul row dim.
    inp = jnp.pad(inp, ((0, Bp - B), (0, 0), (0, Ep - E)))     # (Bp, T, Ep)
    x2d = jnp.transpose(inp, (1, 0, 2)).reshape(T * Bp, Ep)    # (T*Bp, Ep)
    x2d = x2d.astype(jnp.bfloat16)                             # MXU-native operand dtype

    # ---- weight prep: transpose + pad so each gate occupies a 128-lane-aligned slice ----
    def gate_pack(w, kp):
        # w: (4H, K) in torch gate order i,f,g,o  ->  (Kp, 4*Hp), gate g at cols [g*Hp, g*Hp+H)
        k = w.shape[1]
        wg = w.reshape(4, H, k)
        wg = jnp.pad(wg, ((0, 0), (0, Hp - H), (0, kp - k)))   # (4, Hp, Kp)
        return jnp.transpose(wg, (2, 0, 1)).reshape(kp, 4 * Hp)

    wih_t = gate_pack(w_ih, Ep).astype(jnp.bfloat16)           # (Ep, 4Hp)
    whh_t = gate_pack(w_hh, Hp).astype(jnp.bfloat16)           # (Hp, 4Hp)
    bias = jnp.pad((b_ih + b_hh).reshape(4, H),
                   ((0, 0), (0, Hp - H))).reshape(1, 4 * Hp)   # (1, 4Hp) f32
    wout_t = jnp.pad(w_out, ((0, Vp - V), (0, Hp - H))).T.astype(jnp.bfloat16)  # (Hp, Vp)
    bout = jnp.pad(b_out, (0, Vp - V)).reshape(1, Vp)          # (1, Vp) f32

    kernel = functools.partial(_decoder_fused_kernel, T=T, Bp=Bp, Hp=Hp)

    out2d = pl.pallas_call(
        kernel,
        out_shape=jax.ShapeDtypeStruct((T * Bp, Vp), jnp.float32),
        grid_spec=pltpu.PrefetchScalarGridSpec(
            num_scalar_prefetch=0,
            # Single invocation: the recurrence is an in-kernel loop, so weights are
            # DMA'd to VMEM exactly once and there is no per-timestep grid overhead.
            grid=(1,),
            in_specs=[
                pl.BlockSpec((T * Bp, Ep), lambda i: (0, 0)),      # x (time-major)
                pl.BlockSpec((Ep, 4 * Hp), lambda i: (0, 0)),      # W_ih^T (padded)
                pl.BlockSpec((Hp, 4 * Hp), lambda i: (0, 0)),      # W_hh^T (padded)
                pl.BlockSpec((1, 4 * Hp), lambda i: (0, 0)),       # bias
                pl.BlockSpec((Hp, Vp), lambda i: (0, 0)),          # W_out^T (padded)
                pl.BlockSpec((1, Vp), lambda i: (0, 0)),           # b_out
            ],
            out_specs=pl.BlockSpec((T * Bp, Vp), lambda i: (0, 0)),
            scratch_shapes=[
                pltpu.VMEM((T * Bp, 4 * Hp), jnp.float32),         # gates_x
                pltpu.VMEM((T * Bp, Hp), jnp.float32),             # all hidden states
            ],
        ),
        compiler_params=pltpu.CompilerParams(
            dimension_semantics=("arbitrary",),      # recurrence is sequential
            vmem_limit_bytes=32 * 1024 * 1024,       # keep weights + scratch resident
        ),
    )(x2d, wih_t, whh_t, bias, wout_t, bout)

    # Strip padding, return batch_first (B, T, V). These are tiny (<40 KiB) copies.
    out = out2d.reshape(T, Bp, Vp)[:, :B, :V]
    return jnp.transpose(out, (1, 0, 2))


def _reference_forward(params, features, captions, matmul_dtype=jnp.float32):
    """Pure-JAX reference mirroring torch.nn.LSTM (num_layers=1, zero initial state).

    `matmul_dtype=jnp.bfloat16` rounds matmul operands exactly like the kernel does
    (bf16 inputs, f32 accumulation) for an apples-to-apples numerical check.
    """
    embed_w = params["embed_w"]
    w_ih, w_hh = params["w_ih"], params["w_hh"]
    b = params["b_ih"] + params["b_hh"]
    w_out, b_out = params["w_out"], params["b_out"]
    H = w_hh.shape[1]

    def r(a):
        return a.astype(matmul_dtype).astype(jnp.float32)

    caps = captions[:, :-1]
    embeds = jnp.take(embed_w, caps, axis=0)
    inp = jnp.concatenate([features[:, None, :], embeds], 1)  # (B, T, E)
    B = inp.shape[0]
    hp = jax.lax.Precision.HIGHEST

    def step(carry, x_t):
        h, c = carry
        gates = (jnp.dot(r(x_t), r(w_ih).T, precision=hp)
                 + jnp.dot(r(h), r(w_hh).T, precision=hp) + b)
        i = jax.nn.sigmoid(gates[:, 0 * H:1 * H])
        f = jax.nn.sigmoid(gates[:, 1 * H:2 * H])
        g = jnp.tanh(gates[:, 2 * H:3 * H])
        o = jax.nn.sigmoid(gates[:, 3 * H:4 * H])
        c = f * c + i * g
        h = o * jnp.tanh(c)
        return (h, c), h

    init = (jnp.zeros((B, H), jnp.float32), jnp.zeros((B, H), jnp.float32))
    _, hs = jax.lax.scan(step, init, jnp.transpose(inp, (1, 0, 2)))
    hs = jnp.transpose(hs, (1, 0, 2))                          # (B, T, H)
    return jnp.dot(r(hs), r(w_out).T, precision=hp) + b_out


def init_params(key, embed_size, hidden_size, vocab_size):
    ks = jax.random.split(key, 7)
    k = 1.0 / jnp.sqrt(hidden_size)
    u = lambda kk, shape, s: jax.random.uniform(kk, shape, jnp.float32, -s, s)
    return {
        "embed_w": jax.random.normal(ks[0], (vocab_size, embed_size), jnp.float32),
        "w_ih": u(ks[1], (4 * hidden_size, embed_size), k),
        "w_hh": u(ks[2], (4 * hidden_size, hidden_size), k),
        "b_ih": u(ks[3], (4 * hidden_size,), k),
        "b_hh": u(ks[4], (4 * hidden_size,), k),
        "w_out": u(ks[5], (vocab_size, hidden_size), k),
        "b_out": u(ks[6], (vocab_size,), k),
    }


if __name__ == "__main__":
    # Small shapes consistent with DecoderRNN.forward.
    B, Tc = 2, 9            # captions length 9 -> sequence length T = 1 + 8 = 9
    embed_size = 32
    hidden_size = 32
    vocab_size = 40

    key = jax.random.PRNGKey(0)
    kp, kf, kc = jax.random.split(key, 3)

    params = init_params(kp, embed_size, hidden_size, vocab_size)
    features = jax.random.normal(kf, (B, embed_size), jnp.float32)
    captions = jax.random.randint(kc, (B, Tc), 0, vocab_size, jnp.int32)

    out = decoder_rnn_forward(params, features, captions)
    out = jax.block_until_ready(out)
    assert out.shape == (B, Tc, vocab_size), out.shape

    # Matched-precision check (bf16 matmul operands, f32 accumulation — like the kernel).
    ref_bf16 = _reference_forward(params, features, captions, jnp.bfloat16)
    err_bf16 = float(jnp.max(jnp.abs(out - ref_bf16)))
    assert jnp.allclose(out, ref_bf16, atol=2e-3, rtol=2e-3), err_bf16

    # Sanity check against the full-f32 semantics of the original torch module.
    ref_f32 = _reference_forward(params, features, captions, jnp.float32)
    err_f32 = float(jnp.max(jnp.abs(out - ref_f32)))
    assert jnp.allclose(out, ref_f32, atol=1e-1, rtol=1e-1), err_f32

    print("KERNEL_OK")
</pallas_src>

<mosaic_0001>
module attributes {stable_mosaic.version = 11 : i64} {
  func.func @_decoder_fused_kernel(%arg0: i32, %arg1: memref<72x128xbf16, #tpu.memory_space<vmem>>, %arg2: memref<128x512xbf16, #tpu.memory_space<vmem>>, %arg3: memref<128x512xbf16, #tpu.memory_space<vmem>>, %arg4: memref<1x512xf32, #tpu.memory_space<vmem>>, %arg5: memref<128x128xbf16, #tpu.memory_space<vmem>>, %arg6: memref<1x128xf32, #tpu.memory_space<vmem>>, %arg7: memref<72x128xf32, #tpu.memory_space<vmem>>, %arg8: memref<72x512xf32, #tpu.memory_space<vmem>>, %arg9: memref<72x128xf32, #tpu.memory_space<vmem>>) attributes {dimension_semantics = [#tpu.dimension_semantics<arbitrary>], iteration_bounds = array<i64: 1>, scalar_prefetch = 0 : i64, scratch_operands = 2 : i64, tpu.core_type = #tpu.core_type<tc>, window_params = [{pipeline_mode = #tpu.pipeline_mode<synchronous>, transform_indices = @transform_0, window_bounds = array<i64: 72, 128>}, {pipeline_mode = #tpu.pipeline_mode<synchronous>, transform_indices = @transform_1, window_bounds = array<i64: 128, 512>}, {pipeline_mode = #tpu.pipeline_mode<synchronous>, transform_indices = @transform_2, window_bounds = array<i64: 128, 512>}, {pipeline_mode = #tpu.pipeline_mode<synchronous>, transform_indices = @transform_3, window_bounds = array<i64: 1, 512>}, {pipeline_mode = #tpu.pipeline_mode<synchronous>, transform_indices = @transform_4, window_bounds = array<i64: 128, 128>}, {pipeline_mode = #tpu.pipeline_mode<synchronous>, transform_indices = @transform_5, window_bounds = array<i64: 1, 128>}, {pipeline_mode = #tpu.pipeline_mode<synchronous>, transform_indices = @transform_6, window_bounds = array<i64: 72, 128>}]} {
    %c0 = arith.constant 0 : index
    %c0_0 = arith.constant 0 : index
    %0 = vector.load %arg1[%c0, %c0_0] : memref<72x128xbf16, #tpu.memory_space<vmem>>, vector<72x128xbf16>
    %c0_1 = arith.constant 0 : index
    %c0_2 = arith.constant 0 : index
    %1 = vector.load %arg2[%c0_1, %c0_2] : memref<128x512xbf16, #tpu.memory_space<vmem>>, vector<128x512xbf16>
    %cst = arith.constant dense<0.000000e+00> : vector<72x512xf32>
    %2 = tpu.matmul %0, %1, %cst {dimension_numbers = #tpu.dot_dimension_numbers<[1], [0], [0], [1], [0, 0, 1, 1], [], []>} : vector<72x128xbf16>, vector<128x512xbf16>, vector<72x512xf32> -> vector<72x512xf32>
    %c0_3 = arith.constant 0 : index
    %c0_4 = arith.constant 0 : index
    %3 = vector.load %arg4[%c0_3, %c0_4] : memref<1x512xf32, #tpu.memory_space<vmem>>, vector<1x512xf32>
    %4 = vector.broadcast %3 : vector<1x512xf32> to vector<72x512xf32>
    %5 = arith.addf %2, %4 : vector<72x512xf32>
    %c0_5 = arith.constant 0 : index
    %c0_6 = arith.constant 0 : index
    %6 = vector.load %arg8[%c0_5, %c0_6] : memref<72x512xf32, #tpu.memory_space<vmem>>, vector<72x512xf32>
    tpu.vector_store %arg8[%c0_5, %c0_6], %5 {strides = array<i32>} : memref<72x512xf32, #tpu.memory_space<vmem>>, vector<72x512xf32>,
    %c0_7 = arith.constant 0 : index
    %c0_8 = arith.constant 0 : index
    %7 = vector.load %arg3[%c0_7, %c0_8] : memref<128x512xbf16, #tpu.memory_space<vmem>>, vector<128x512xbf16>
    %cst_9 = arith.constant 0.000000e+00 : f32
    %8 = vector.broadcast %cst_9 : f32 to vector<8x128xf32>
    %cst_10 = arith.constant 0.000000e+00 : f32
    %9 = vector.broadcast %cst_10 : f32 to vector<8x128xf32>
    %c0_11 = arith.constant 0 : index
    %c0_12 = arith.constant 0 : index
    %10 = vector.load %arg8[%c0_11, %c0_12] : memref<72x512xf32, #tpu.memory_space<vmem>>, vector<8x512xf32>
    %11 = arith.truncf %8 : vector<8x128xf32> to vector<8x128xbf16>
    %cst_13 = arith.constant dense<0.000000e+00> : vector<8x512xf32>
    %12 = tpu.matmul %11, %7, %cst_13 {dimension_numbers = #tpu.dot_dimension_numbers<[1], [0], [0], [1], [0, 0, 1, 1], [], []>} : vector<8x128xbf16>, vector<128x512xbf16>, vector<8x512xf32> -> vector<8x512xf32>
    %13 = arith.addf %10, %12 : vector<8x512xf32>
    %14 = vector.extract_strided_slice %13 {offsets = [0, 0], sizes = [8, 128], strides = [1, 1]} : vector<8x512xf32> to vector<8x128xf32>
    %15 = arith.negf %14 : vector<8x128xf32>
    %16 = math.exp %15 : vector<8x128xf32>
    %cst_14 = arith.constant 1.000000e+00 : f32
    %17 = vector.broadcast %cst_14 : f32 to vector<8x128xf32>
    %18 = arith.addf %17, %16 : vector<8x128xf32>
    %19 = arith.divf %17, %18 : vector<8x128xf32>
    %20 = vector.extract_strided_slice %13 {offsets = [0, 128], sizes = [8, 128], strides = [1, 1]} : vector<8x512xf32> to vector<8x128xf32>
    %21 = arith.negf %20 : vector<8x128xf32>
    %22 = math.exp %21 : vector<8x128xf32>
    %cst_15 = arith.constant 1.000000e+00 : f32
    %23 = vector.broadcast %cst_15 : f32 to vector<8x128xf32>
    %24 = arith.addf %23, %22 : vector<8x128xf32>
    %25 = arith.divf %23, %24 : vector<8x128xf32>
    %26 = vector.extract_strided_slice %13 {offsets = [0, 256], sizes = [8, 128], strides = [1, 1]} : vector<8x512xf32> to vector<8x128xf32>
    %27 = math.tanh %26 : vector<8x128xf32>
    %28 = vector.extract_strided_slice %13 {offsets = [0, 384], sizes = [8, 128], strides = [1, 1]} : vector<8x512xf32> to vector<8x128xf32>
    %29 = arith.negf %28 : vector<8x128xf32>
    %30 = math.exp %29 : vector<8x128xf32>
    %cst_16 = arith.constant 1.000000e+00 : f32
    %31 = vector.broadcast %cst_16 : f32 to vector<8x128xf32>
    %32 = arith.addf %31, %30 : vector<8x128xf32>
    %33 = arith.divf %31, %32 : vector<8x128xf32>
    %34 = arith.mulf %25, %9 : vector<8x128xf32>
    %35 = arith.mulf %19, %27 : vector<8x128xf32>
    %36 = arith.addf %34, %35 : vector<8x128xf32>
    %37 = math.tanh %36 : vector<8x128xf32>
    %38 = arith.mulf %33, %37 : vector<8x128xf32>
    %c0_17 = arith.constant 0 : index
    %c0_18 = arith.constant 0 : index
    %39 = vector.load %arg9[%c0_17, %c0_18] : memref<72x128xf32, #tpu.memory_space<vmem>>, vector<8x128xf32>
    tpu.vector_store %arg9[%c0_17, %c0_18], %38 {strides = array<i32>} : memref<72x128xf32, #tpu.memory_space<vmem>>, vector<8x128xf32>,
    %c8 = arith.constant 8 : index
    %c0_19 = arith.constant 0 : index
    %40 = vector.load %arg8[%c8, %c0_19] : memref<72x512xf32, #tpu.memory_space<vmem>>, vector<8x512xf32>
    %41 = arith.truncf %38 : vector<8x128xf32> to vector<8x128xbf16>
    %cst_20 = arith.constant dense<0.000000e+00> : vector<8x512xf32>
    %42 = tpu.matmul %41, %7, %cst_20 {dimension_numbers = #tpu.dot_dimension_numbers<[1], [0], [0], [1], [0, 0, 1, 1], [], []>} : vector<8x128xbf16>, vector<128x512xbf16>, vector<8x512xf32> -> vector<8x512xf32>
    %43 = arith.addf %40, %42 : vector<8x512xf32>
    %44 = vector.extract_strided_slice %43 {offsets = [0, 0], sizes = [8, 128], strides = [1, 1]} : vector<8x512xf32> to vector<8x128xf32>
    %45 = arith.negf %44 : vector<8x128xf32>
    %46 = math.exp %45 : vector<8x128xf32>
    %cst_21 = arith.constant 1.000000e+00 : f32
    %47 = vector.broadcast %cst_21 : f32 to vector<8x128xf32>
    %48 = arith.addf %47, %46 : vector<8x128xf32>
    %49 = arith.divf %47, %48 : vector<8x128xf32>
    %50 = vector.extract_strided_slice %43 {offsets = [0, 128], sizes = [8, 128], strides = [1, 1]} : vector<8x512xf32> to vector<8x128xf32>
    %51 = arith.negf %50 : vector<8x128xf32>
    %52 = math.exp %51 : vector<8x128xf32>
    %cst_22 = arith.constant 1.000000e+00 : f32
    %53 = vector.broadcast %cst_22 : f32 to vector<8x128xf32>
    %54 = arith.addf %53, %52 : vector<8x128xf32>
    %55 = arith.divf %53, %54 : vector<8x128xf32>
    %56 = vector.extract_strided_slice %43 {offsets = [0, 256], sizes = [8, 128], strides = [1, 1]} : vector<8x512xf32> to vector<8x128xf32>
    %57 = math.tanh %56 : vector<8x128xf32>
    %58 = vector.extract_strided_slice %43 {offsets = [0, 384], sizes = [8, 128], strides = [1, 1]} : vector<8x512xf32> to vector<8x128xf32>
    %59 = arith.negf %58 : vector<8x128xf32>
    %60 = math.exp %59 : vector<8x128xf32>
    %cst_23 = arith.constant 1.000000e+00 : f32
    %61 = vector.broadcast %cst_23 : f32 to vector<8x128xf32>
    %62 = arith.addf %61, %60 : vector<8x128xf32>
    %63 = arith.divf %61, %62 : vector<8x128xf32>
    %64 = arith.mulf %55, %36 : vector<8x128xf32>
    %65 = arith.mulf %49, %57 : vector<8x128xf32>
    %66 = arith.addf %64, %65 : vector<8x128xf32>
    %67 = math.tanh %66 : vector<8x128xf32>
    %68 = arith.mulf %63, %67 : vector<8x128xf32>
    %c8_24 = arith.constant 8 : index
    %c0_25 = arith.constant 0 : index
    %69 = vector.load %arg9[%c8_24, %c0_25] : memref<72x128xf32, #tpu.memory_space<vmem>>, vector<8x128xf32>
    tpu.vector_store %arg9[%c8_24, %c0_25], %68 {strides = array<i32>} : memref<72x128xf32, #tpu.memory_space<vmem>>, vector<8x128xf32>,
    %c16 = arith.constant 16 : index
    %c0_26 = arith.constant 0 : index
    %70 = vector.load %arg8[%c16, %c0_26] : memref<72x512xf32, #tpu.memory_space<vmem>>, vector<8x512xf32>
    %71 = arith.truncf %68 : vector<8x128xf32> to vector<8x128xbf16>
    %cst_27 = arith.constant dense<0.000000e+00> : vector<8x512xf32>
    %72 = tpu.matmul %71, %7, %cst_27 {dimension_numbers = #tpu.dot_dimension_numbers<[1], [0], [0], [1], [0, 0, 1, 1], [], []>} : vector<8x128xbf16>, vector<128x512xbf16>, vector<8x512xf32> -> vector<8x512xf32>
    %73 = arith.addf %70, %72 : vector<8x512xf32>
    %74 = vector.extract_strided_slice %73 {offsets = [0, 0], sizes = [8, 128], strides = [1, 1]} : vector<8x512xf32> to vector<8x128xf32>
    %75 = arith.negf %74 : vector<8x128xf32>
    %76 = math.exp %75 : vector<8x128xf32>
    %cst_28 = arith.constant 1.000000e+00 : f32
    %77 = vector.broadcast %cst_28 : f32 to vector<8x128xf32>
    %78 = arith.addf %77, %76 : vector<8x128xf32>
    %79 = arith.divf %77, %78 : vector<8x128xf32>
    %80 = vector.extract_strided_slice %73 {offsets = [0, 128], sizes = [8, 128], strides = [1, 1]} : vector<8x512xf32> to vector<8x128xf32>
    %81 = arith.negf %80 : vector<8x128xf32>
    %82 = math.exp %81 : vector<8x128xf32>
    %cst_29 = arith.constant 1.000000e+00 : f32
    %83 = vector.broadcast %cst_29 : f32 to vector<8x128xf32>
    %84 = arith.addf %83, %82 : vector<8x128xf32>
    %85 = arith.divf %83, %84 : vector<8x128xf32>
    %86 = vector.extract_strided_slice %73 {offsets = [0, 256], sizes = [8, 128], strides = [1, 1]} : vector<8x512xf32> to vector<8x128xf32>
    %87 = math.tanh %86 : vector<8x128xf32>
    %88 = vector.extract_strided_slice %73 {offsets = [0, 384], sizes = [8, 128], strides = [1, 1]} : vector<8x512xf32> to vector<8x128xf32>
    %89 = arith.negf %88 : vector<8x128xf32>
    %90 = math.exp %89 : vector<8x128xf32>
    %cst_30 = arith.constant 1.000000e+00 : f32
    %91 = vector.broadcast %cst_30 : f32 to vector<8x128xf32>
    %92 = arith.addf %91, %90 : vector<8x128xf32>
    %93 = arith.divf %91, %92 : vector<8x128xf32>
    %94 = arith.mulf %85, %66 : vector<8x128xf32>
    %95 = arith.mulf %79, %87 : vector<8x128xf32>
    %96 = arith.addf %94, %95 : vector<8x128xf32>
    %97 = math.tanh %96 : vector<8x128xf32>
    %98 = arith.mulf %93, %97 : vector<8x128xf32>
    %c16_31 = arith.constant 16 : index
    %c0_32 = arith.constant 0 : index
    %99 = vector.load %arg9[%c16_31, %c0_32] : memref<72x128xf32, #tpu.memory_space<vmem>>, vector<8x128xf32>
    tpu.vector_store %arg9[%c16_31, %c0_32], %98 {strides = array<i32>} : memref<72x128xf32, #tpu.memory_space<vmem>>, vector<8x128xf32>,
    %c24 = arith.constant 24 : index
    %c0_33 = arith.constant 0 : index
    %100 = vector.load %arg8[%c24, %c0_33] : memref<72x512xf32, #tpu.memory_space<vmem>>, vector<8x512xf32>
    %101 = arith.truncf %98 : vector<8x128xf32> to vector<8x128xbf16>
    %cst_34 = arith.constant dense<0.000000e+00> : vector<8x512xf32>
    %102 = tpu.matmul %101, %7, %cst_34 {dimension_numbers = #tpu.dot_dimension_numbers<[1], [0], [0], [1], [0, 0, 1, 1], [], []>} : vector<8x128xbf16>, vector<128x512xbf16>, vector<8x512xf32> -> vector<8x512xf32>
    %103 = arith.addf %100, %102 : vector<8x512xf32>
    %104 = vector.extract_strided_slice %103 {offsets = [0, 0], sizes = [8, 128], strides = [1, 1]} : vector<8x512xf32> to vector<8x128xf32>
    %105 = arith.negf %104 : vector<8x128xf32>
    %106 = math.exp %105 : vector<8x128xf32>
    %cst_35 = arith.constant 1.000000e+00 : f32
    %107 = vector.broadcast %cst_35 : f32 to vector<8x128xf32>
    %108 = arith.addf %107, %106 : vector<8x128xf32>
    %109 = arith.divf %107, %108 : vector<8x128xf32>
    %110 = vector.extract_strided_slice %103 {offsets = [0, 128], sizes = [8, 128], strides = [1, 1]} : vector<8x512xf32> to vector<8x128xf32>
    %111 = arith.negf %110 : vector<8x128xf32>
    %112 = math.exp %111 : vector<8x128xf32>
    %cst_36 = arith.constant 1.000000e+00 : f32
    %113 = vector.broadcast %cst_36 : f32 to vector<8x128xf32>
    %114 = arith.addf %113, %112 : vector<8x128xf32>
    %115 = arith.divf %113, %114 : vector<8x128xf32>
    %116 = vector.extract_strided_slice %103 {offsets = [0, 256], sizes = [8, 128], strides = [1, 1]} : vector<8x512xf32> to vector<8x128xf32>
    %117 = math.tanh %116 : vector<8x128xf32>
    %118 = vector.extract_strided_slice %103 {offsets = [0, 384], sizes = [8, 128], strides = [1, 1]} : vector<8x512xf32> to vector<8x128xf32>
    %119 = arith.negf %118 : vector<8x128xf32>
    %120 = math.exp %119 : vector<8x128xf32>
    %cst_37 = arith.constant 1.000000e+00 : f32
    %121 = vector.broadcast %cst_37 : f32 to vector<8x128xf32>
    %122 = arith.addf %121, %120 : vector<8x128xf32>
    %123 = arith.divf %121, %122 : vector<8x128xf32>
    %124 = arith.mulf %115, %96 : vector<8x128xf32>
    %125 = arith.mulf %109, %117 : vector<8x128xf32>
    %126 = arith.addf %124, %125 : vector<8x128xf32>
    %127 = math.tanh %126 : vector<8x128xf32>
    %128 = arith.mulf %123, %127 : vector<8x128xf32>
    %c24_38 = arith.constant 24 : index
    %c0_39 = arith.constant 0 : index
    %129 = vector.load %arg9[%c24_38, %c0_39] : memref<72x128xf32, #tpu.memory_space<vmem>>, vector<8x128xf32>
    tpu.vector_store %arg9[%c24_38, %c0_39], %128 {strides = array<i32>} : memref<72x128xf32, #tpu.memory_space<vmem>>, vector<8x128xf32>,
    %c32 = arith.constant 32 : index
    %c0_40 = arith.constant 0 : index
    %130 = vector.load %arg8[%c32, %c0_40] : memref<72x512xf32, #tpu.memory_space<vmem>>, vector<8x512xf32>
    %131 = arith.truncf %128 : vector<8x128xf32> to vector<8x128xbf16>
    %cst_41 = arith.constant dense<0.000000e+00> : vector<8x512xf32>
    %132 = tpu.matmul %131, %7, %cst_41 {dimension_numbers = #tpu.dot_dimension_numbers<[1], [0], [0], [1], [0, 0, 1, 1], [], []>} : vector<8x128xbf16>, vector<128x512xbf16>, vector<8x512xf32> -> vector<8x512xf32>
    %133 = arith.addf %130, %132 : vector<8x512xf32>
    %134 = vector.extract_strided_slice %133 {offsets = [0, 0], sizes = [8, 128], strides = [1, 1]} : vector<8x512xf32> to vector<8x128xf32>
    %135 = arith.negf %134 : vector<8x128xf32>
    %136 = math.exp %135 : vector<8x128xf32>
    %cst_42 = arith.constant 1.000000e+00 : f32
    %137 = vector.broadcast %cst_42 : f32 to vector<8x128xf32>
    %138 = arith.addf %137, %136 : vector<8x128xf32>
    %139 = arith.divf %137, %138 : vector<8x128xf32>
    %140 = vector.extract_strided_slice %133 {offsets = [0, 128], sizes = [8, 128], strides = [1, 1]} : vector<8x512xf32> to vector<8x128xf32>
    %141 = arith.negf %140 : vector<8x128xf32>
    %142 = math.exp %141 : vector<8x128xf32>
    %cst_43 = arith.constant 1.000000e+00 : f32
    %143 = vector.broadcast %cst_43 : f32 to vector<8x128xf32>
    %144 = arith.addf %143, %142 : vector<8x128xf32>
    %145 = arith.divf %143, %144 : vector<8x128xf32>
    %146 = vector.extract_strided_slice %133 {offsets = [0, 256], sizes = [8, 128], strides = [1, 1]} : vector<8x512xf32> to vector<8x128xf32>
    %147 = math.tanh %146 : vector<8x128xf32>
    %148 = vector.extract_strided_slice %133 {offsets = [0, 384], sizes = [8, 128], strides = [1, 1]} : vector<8x512xf32> to vector<8x128xf32>
    %149 = arith.negf %148 : vector<8x128xf32>
    %150 = math.exp %149 : vector<8x128xf32>
    %cst_44 = arith.constant 1.000000e+00 : f32
    %151 = vector.broadcast %cst_44 : f32 to vector<8x128xf32>
    %152 = arith.addf %151, %150 : vector<8x128xf32>
    %153 = arith.divf %151, %152 : vector<8x128xf32>
    %154 = arith.mulf %145, %126 : vector<8x128xf32>
    %155 = arith.mulf %139, %147 : vector<8x128xf32>
    %156 = arith.addf %154, %155 : vector<8x128xf32>
    %157 = math.tanh %156 : vector<8x128xf32>
    %158 = arith.mulf %153, %157 : vector<8x128xf32>
    %c32_45 = arith.constant 32 : index
    %c0_46 = arith.constant 0 : index
    %159 = vector.load %arg9[%c32_45, %c0_46] : memref<72x128xf32, #tpu.memory_space<vmem>>, vector<8x128xf32>
    tpu.vector_store %arg9[%c32_45, %c0_46], %158 {strides = array<i32>} : memref<72x128xf32, #tpu.memory_space<vmem>>, vector<8x128xf32>,
    %c40 = arith.constant 40 : index
    %c0_47 = arith.constant 0 : index
    %160 = vector.load %arg8[%c40, %c0_47] : memref<72x512xf32, #tpu.memory_space<vmem>>, vector<8x512xf32>
    %161 = arith.truncf %158 : vector<8x128xf32> to vector<8x128xbf16>
    %cst_48 = arith.constant dense<0.000000e+00> : vector<8x512xf32>
    %162 = tpu.matmul %161, %7, %cst_48 {dimension_numbers = #tpu.dot_dimension_numbers<[1], [0], [0], [1], [0, 0, 1, 1], [], []>} : vector<8x128xbf16>, vector<128x512xbf16>, vector<8x512xf32> -> vector<8x512xf32>
    %163 = arith.addf %160, %162 : vector<8x512xf32>
    %164 = vector.extract_strided_slice %163 {offsets = [0, 0], sizes = [8, 128], strides = [1, 1]} : vector<8x512xf32> to vector<8x128xf32>
    %165 = arith.negf %164 : vector<8x128xf32>
    %166 = math.exp %165 : vector<8x128xf32>
    %cst_49 = arith.constant 1.000000e+00 : f32
    %167 = vector.broadcast %cst_49 : f32 to vector<8x128xf32>
    %168 = arith.addf %167, %166 : vector<8x128xf32>
    %169 = arith.divf %167, %168 : vector<8x128xf32>
    %170 = vector.extract_strided_slice %163 {offsets = [0, 128], sizes = [8, 128], strides = [1, 1]} : vector<8x512xf32> to vector<8x128xf32>
    %171 = arith.negf %170 : vector<8x128xf32>
    %172 = math.exp %171 : vector<8x128xf32>
    %cst_50 = arith.constant 1.000000e+00 : f32
    %173 = vector.broadcast %cst_50 : f32 to vector<8x128xf32>
    %174 = arith.addf %173, %172 : vector<8x128xf32>
    %175 = arith.divf %173, %174 : vector<8x128xf32>
    %176 = vector.extract_strided_slice %163 {offsets = [0, 256], sizes = [8, 128], strides = [1, 1]} : vector<8x512xf32> to vector<8x128xf32>
    %177 = math.tanh %176 : vector<8x128xf32>
    %178 = vector.extract_strided_slice %163 {offsets = [0, 384], sizes = [8, 128], strides = [1, 1]} : vector<8x512xf32> to vector<8x128xf32>
    %179 = arith.negf %178 : vector<8x128xf32>
    %180 = math.exp %179 : vector<8x128xf32>
    %cst_51 = arith.constant 1.000000e+00 : f32
    %181 = vector.broadcast %cst_51 : f32 to vector<8x128xf32>
    %182 = arith.addf %181, %180 : vector<8x128xf32>
    %183 = arith.divf %181, %182 : vector<8x128xf32>
    %184 = arith.mulf %175, %156 : vector<8x128xf32>
    %185 = arith.mulf %169, %177 : vector<8x128xf32>
    %186 = arith.addf %184, %185 : vector<8x128xf32>
    %187 = math.tanh %186 : vector<8x128xf32>
    %188 = arith.mulf %183, %187 : vector<8x128xf32>
    %c40_52 = arith.constant 40 : index
    %c0_53 = arith.constant 0 : index
    %189 = vector.load %arg9[%c40_52, %c0_53] : memref<72x128xf32, #tpu.memory_space<vmem>>, vector<8x128xf32>
    tpu.vector_store %arg9[%c40_52, %c0_53], %188 {strides = array<i32>} : memref<72x128xf32, #tpu.memory_space<vmem>>, vector<8x128xf32>,
    %c48 = arith.constant 48 : index
    %c0_54 = arith.constant 0 : index
    %190 = vector.load %arg8[%c48, %c0_54] : memref<72x512xf32, #tpu.memory_space<vmem>>, vector<8x512xf32>
    %191 = arith.truncf %188 : vector<8x128xf32> to vector<8x128xbf16>
    %cst_55 = arith.constant dense<0.000000e+00> : vector<8x512xf32>
    %192 = tpu.matmul %191, %7, %cst_55 {dimension_numbers = #tpu.dot_dimension_numbers<[1], [0], [0], [1], [0, 0, 1, 1], [], []>} : vector<8x128xbf16>, vector<128x512xbf16>, vector<8x512xf32> -> vector<8x512xf32>
    %193 = arith.addf %190, %192 : vector<8x512xf32>
    %194 = vector.extract_strided_slice %193 {offsets = [0, 0], sizes = [8, 128], strides = [1, 1]} : vector<8x512xf32> to vector<8x128xf32>
    %195 = arith.negf %194 : vector<8x128xf32>
    %196 = math.exp %195 : vector<8x128xf32>
    %cst_56 = arith.constant 1.000000e+00 : f32
    %197 = vector.broadcast %cst_56 : f32 to vector<8x128xf32>
    %198 = arith.addf %197, %196 : vector<8x128xf32>
    %199 = arith.divf %197, %198 : vector<8x128xf32>
    %200 = vector.extract_strided_slice %193 {offsets = [0, 128], sizes = [8, 128], strides = [1, 1]} : vector<8x512xf32> to vector<8x128xf32>
    %201 = arith.negf %200 : vector<8x128xf32>
    %202 = math.exp %201 : vector<8x128xf32>
    %cst_57 = arith.constant 1.000000e+00 : f32
    %203 = vector.broadcast %cst_57 : f32 to vector<8x128xf32>
    %204 = arith.addf %203, %202 : vector<8x128xf32>
    %205 = arith.divf %203, %204 : vector<8x128xf32>
    %206 = vector.extract_strided_slice %193 {offsets = [0, 256], sizes = [8, 128], strides = [1, 1]} : vector<8x512xf32> to vector<8x128xf32>
    %207 = math.tanh %206 : vector<8x128xf32>
    %208 = vector.extract_strided_slice %193 {offsets = [0, 384], sizes = [8, 128], strides = [1, 1]} : vector<8x512xf32> to vector<8x128xf32>
    %209 = arith.negf %208 : vector<8x128xf32>
    %210 = math.exp %209 : vector<8x128xf32>
    %cst_58 = arith.constant 1.000000e+00 : f32
    %211 = vector.broadcast %cst_58 : f32 to vector<8x128xf32>
    %212 = arith.addf %211, %210 : vector<8x128xf32>
    %213 = arith.divf %211, %212 : vector<8x128xf32>
    %214 = arith.mulf %205, %186 : vector<8x128xf32>
    %215 = arith.mulf %199, %207 : vector<8x128xf32>
    %216 = arith.addf %214, %215 : vector<8x128xf32>
    %217 = math.tanh %216 : vector<8x128xf32>
    %218 = arith.mulf %213, %217 : vector<8x128xf32>
    %c48_59 = arith.constant 48 : index
    %c0_60 = arith.constant 0 : index
    %219 = vector.load %arg9[%c48_59, %c0_60] : memref<72x128xf32, #tpu.memory_space<vmem>>, vector<8x128xf32>
    tpu.vector_store %arg9[%c48_59, %c0_60], %218 {strides = array<i32>} : memref<72x128xf32, #tpu.memory_space<vmem>>, vector<8x128xf32>,
    %c56 = arith.constant 56 : index
    %c0_61 = arith.constant 0 : index
    %220 = vector.load %arg8[%c56, %c0_61] : memref<72x512xf32, #tpu.memory_space<vmem>>, vector<8x512xf32>
    %221 = arith.truncf %218 : vector<8x128xf32> to vector<8x128xbf16>
    %cst_62 = arith.constant dense<0.000000e+00> : vector<8x512xf32>
    %222 = tpu.matmul %221, %7, %cst_62 {dimension_numbers = #tpu.dot_dimension_numbers<[1], [0], [0], [1], [0, 0, 1, 1], [], []>} : vector<8x128xbf16>, vector<128x512xbf16>, vector<8x512xf32> -> vector<8x512xf32>
    %223 = arith.addf %220, %222 : vector<8x512xf32>
    %224 = vector.extract_strided_slice %223 {offsets = [0, 0], sizes = [8, 128], strides = [1, 1]} : vector<8x512xf32> to vector<8x128xf32>
    %225 = arith.negf %224 : vector<8x128xf32>
    %226 = math.exp %225 : vector<8x128xf32>
    %cst_63 = arith.constant 1.000000e+00 : f32
    %227 = vector.broadcast %cst_63 : f32 to vector<8x128xf32>
    %228 = arith.addf %227, %226 : vector<8x128xf32>
    %229 = arith.divf %227, %228 : vector<8x128xf32>
    %230 = vector.extract_strided_slice %223 {offsets = [0, 128], sizes = [8, 128], strides = [1, 1]} : vector<8x512xf32> to vector<8x128xf32>
    %231 = arith.negf %230 : vector<8x128xf32>
    %232 = math.exp %231 : vector<8x128xf32>
    %cst_64 = arith.constant 1.000000e+00 : f32
    %233 = vector.broadcast %cst_64 : f32 to vector<8x128xf32>
    %234 = arith.addf %233, %232 : vector<8x128xf32>
    %235 = arith.divf %233, %234 : vector<8x128xf32>
    %236 = vector.extract_strided_slice %223 {offsets = [0, 256], sizes = [8, 128], strides = [1, 1]} : vector<8x512xf32> to vector<8x128xf32>
    %237 = math.tanh %236 : vector<8x128xf32>
    %238 = vector.extract_strided_slice %223 {offsets = [0, 384], sizes = [8, 128], strides = [1, 1]} : vector<8x512xf32> to vector<8x128xf32>
    %239 = arith.negf %238 : vector<8x128xf32>
    %240 = math.exp %239 : vector<8x128xf32>
    %cst_65 = arith.constant 1.000000e+00 : f32
    %241 = vector.broadcast %cst_65 : f32 to vector<8x128xf32>
    %242 = arith.addf %241, %240 : vector<8x128xf32>
    %243 = arith.divf %241, %242 : vector<8x128xf32>
    %244 = arith.mulf %235, %216 : vector<8x128xf32>
    %245 = arith.mulf %229, %237 : vector<8x128xf32>
    %246 = arith.addf %244, %245 : vector<8x128xf32>
    %247 = math.tanh %246 : vector<8x128xf32>
    %248 = arith.mulf %243, %247 : vector<8x128xf32>
    %c56_66 = arith.constant 56 : index
    %c0_67 = arith.constant 0 : index
    %249 = vector.load %arg9[%c56_66, %c0_67] : memref<72x128xf32, #tpu.memory_space<vmem>>, vector<8x128xf32>
    tpu.vector_store %arg9[%c56_66, %c0_67], %248 {strides = array<i32>} : memref<72x128xf32, #tpu.memory_space<vmem>>, vector<8x128xf32>,
    %c64 = arith.constant 64 : index
    %c0_68 = arith.constant 0 : index
    %250 = vector.load %arg8[%c64, %c0_68] : memref<72x512xf32, #tpu.memory_space<vmem>>, vector<8x512xf32>
    %251 = arith.truncf %248 : vector<8x128xf32> to vector<8x128xbf16>
    %cst_69 = arith.constant dense<0.000000e+00> : vector<8x512xf32>
    %252 = tpu.matmul %251, %7, %cst_69 {dimension_numbers = #tpu.dot_dimension_numbers<[1], [0], [0], [1], [0, 0, 1, 1], [], []>} : vector<8x128xbf16>, vector<128x512xbf16>, vector<8x512xf32> -> vector<8x512xf32>
    %253 = arith.addf %250, %252 : vector<8x512xf32>
    %254 = vector.extract_strided_slice %253 {offsets = [0, 0], sizes = [8, 128], strides = [1, 1]} : vector<8x512xf32> to vector<8x128xf32>
    %255 = arith.negf %254 : vector<8x128xf32>
    %256 = math.exp %255 : vector<8x128xf32>
    %cst_70 = arith.constant 1.000000e+00 : f32
    %257 = vector.broadcast %cst_70 : f32 to vector<8x128xf32>
    %258 = arith.addf %257, %256 : vector<8x128xf32>
    %259 = arith.divf %257, %258 : vector<8x128xf32>
    %260 = vector.extract_strided_slice %253 {offsets = [0, 128], sizes = [8, 128], strides = [1, 1]} : vector<8x512xf32> to vector<8x128xf32>
    %261 = arith.negf %260 : vector<8x128xf32>
    %262 = math.exp %261 : vector<8x128xf32>
    %cst_71 = arith.constant 1.000000e+00 : f32
    %263 = vector.broadcast %cst_71 : f32 to vector<8x128xf32>
    %264 = arith.addf %263, %262 : vector<8x128xf32>
    %265 = arith.divf %263, %264 : vector<8x128xf32>
    %266 = vector.extract_strided_slice %253 {offsets = [0, 256], sizes = [8, 128], strides = [1, 1]} : vector<8x512xf32> to vector<8x128xf32>
    %267 = math.tanh %266 : vector<8x128xf32>
    %268 = vector.extract_strided_slice %253 {offsets = [0, 384], sizes = [8, 128], strides = [1, 1]} : vector<8x512xf32> to vector<8x128xf32>
    %269 = arith.negf %268 : vector<8x128xf32>
    %270 = math.exp %269 : vector<8x128xf32>
    %cst_72 = arith.constant 1.000000e+00 : f32
    %271 = vector.broadcast %cst_72 : f32 to vector<8x128xf32>
    %272 = arith.addf %271, %270 : vector<8x128xf32>
    %273 = arith.divf %271, %272 : vector<8x128xf32>
    %274 = arith.mulf %265, %246 : vector<8x128xf32>
    %275 = arith.mulf %259, %267 : vector<8x128xf32>
    %276 = arith.addf %274, %275 : vector<8x128xf32>
    %277 = math.tanh %276 : vector<8x128xf32>
    %278 = arith.mulf %273, %277 : vector<8x128xf32>
    %c64_73 = arith.constant 64 : index
    %c0_74 = arith.constant 0 : index
    %279 = vector.load %arg9[%c64_73, %c0_74] : memref<72x128xf32, #tpu.memory_space<vmem>>, vector<8x128xf32>
    tpu.vector_store %arg9[%c64_73, %c0_74], %278 {strides = array<i32>} : memref<72x128xf32, #tpu.memory_space<vmem>>, vector<8x128xf32>,
    %c0_75 = arith.constant 0 : index
    %c0_76 = arith.constant 0 : index
    %280 = vector.load %arg9[%c0_75, %c0_76] : memref<72x128xf32, #tpu.memory_space<vmem>>, vector<72x128xf32>
    %281 = arith.truncf %280 : vector<72x128xf32> to vector<72x128xbf16>
    %c0_77 = arith.constant 0 : index
    %c0_78 = arith.constant 0 : index
    %282 = vector.load %arg5[%c0_77, %c0_78] : memref<128x128xbf16, #tpu.memory_space<vmem>>, vector<128x128xbf16>
    %cst_79 = arith.constant dense<0.000000e+00> : vector<72x128xf32>
    %283 = tpu.matmul %281, %282, %cst_79 {dimension_numbers = #tpu.dot_dimension_numbers<[1], [0], [0], [1], [0, 0, 1, 1], [], []>} : vector<72x128xbf16>, vector<128x128xbf16>, vector<72x128xf32> -> vector<72x128xf32>
    %c0_80 = arith.constant 0 : index
    %c0_81 = arith.constant 0 : index
    %284 = vector.load %arg6[%c0_80, %c0_81] : memref<1x128xf32, #tpu.memory_space<vmem>>, vector<1x128xf32>
    %285 = vector.broadcast %284 : vector<1x128xf32> to vector<72x128xf32>
    %286 = arith.addf %283, %285 : vector<72x128xf32>
    %c0_82 = arith.constant 0 : index
    %c0_83 = arith.constant 0 : index
    %287 = vector.load %arg7[%c0_82, %c0_83] : memref<72x128xf32, #tpu.memory_space<vmem>>, vector<72x128xf32>
    tpu.vector_store %arg7[%c0_82, %c0_83], %286 {strides = array<i32>} : memref<72x128xf32, #tpu.memory_space<vmem>>, vector<72x128xf32>,
    return
  }
  func.func @transform_0(%arg0: i32) -> (i32, i32) {
    %c0_i32 = arith.constant 0 : i32
    %c0_i32_0 = arith.constant 0 : i32
    %c0_i32_1 = arith.constant 0 : i32
    return %c0_i32, %c0_i32_0 : i32, i32
  }
  func.func @transform_1(%arg0: i32) -> (i32, i32) {
    %c0_i32 = arith.constant 0 : i32
    %c0_i32_0 = arith.constant 0 : i32
    %c0_i32_1 = arith.constant 0 : i32
    return %c0_i32, %c0_i32_0 : i32, i32
  }
  func.func @transform_2(%arg0: i32) -> (i32, i32) {
    %c0_i32 = arith.constant 0 : i32
    %c0_i32_0 = arith.constant 0 : i32
    %c0_i32_1 = arith.constant 0 : i32
    return %c0_i32, %c0_i32_0 : i32, i32
  }
  func.func @transform_3(%arg0: i32) -> (i32, i32) {
    %c0_i32 = arith.constant 0 : i32
    %c0_i32_0 = arith.constant 0 : i32
    %c0_i32_1 = arith.constant 0 : i32
    return %c0_i32, %c0_i32_0 : i32, i32
  }
  func.func @transform_4(%arg0: i32) -> (i32, i32) {
    %c0_i32 = arith.constant 0 : i32
    %c0_i32_0 = arith.constant 0 : i32
    %c0_i32_1 = arith.constant 0 : i32
    return %c0_i32, %c0_i32_0 : i32, i32
  }
  func.func @transform_5(%arg0: i32) -> (i32, i32) {
    %c0_i32 = arith.constant 0 : i32
    %c0_i32_0 = arith.constant 0 : i32
    %c0_i32_1 = arith.constant 0 : i32
    return %c0_i32, %c0_i32_0 : i32, i32
  }
  func.func @transform_6(%arg0: i32) -> (i32, i32) {
    %c0_i32 = arith.constant 0 : i32
    %c0_i32_0 = arith.constant 0 : i32
    %c0_i32_1 = arith.constant 0 : i32
    return %c0_i32, %c0_i32_0 : i32, i32
  }
}

</mosaic_0001>

<llo_original>
// kernel: tpu_custom_call.1
$region0: #{tpu_custom_call.1}
  #allocation0 [shape = 'u32[]', space=smem, size = 0x4, offset = 0x4, fixed_abs, tag = 'smem constant byte address 0x4 - core index']
  #allocation1 [shape = 'u32[144,128]{1,0:T(1,128)}', space=vmem, size = 0x12000, scoped, tag = 'internal scratch']
  #allocation2 [shape = 'f32[72,512]{1,0:T(8,128)}', space=vmem, size = 0x24000, scoped, tag = 'scratch operand']
  #allocation3 [shape = 'f32[72,128]{1,0:T(8,128)}', space=vmem, size = 0x9000, scoped, tag = 'scratch operand']
  %s0 = inlined_call_operand.hbm [shape: bf16[72,128], index: 0, kind: input, shape index: {}]
  %s1 = inlined_call_operand.hbm [shape: bf16[128,512], index: 1, kind: input, shape index: {}]
  %s2 = inlined_call_operand.hbm [shape: bf16[128,512], index: 2, kind: input, shape index: {}]
  %s3 = inlined_call_operand.vmem [shape: f32[1,512], index: 3, kind: input, shape index: {}]
  %s4 = inlined_call_operand.hbm [shape: bf16[128,128], index: 4, kind: input, shape index: {}]
  %s5 = inlined_call_operand.vmem [shape: f32[1,128], index: 5, kind: input, shape index: {}]
  %s6 = inlined_call_operand.hbm [shape: f32[72,128], index: 6, kind: output, shape index: {}]
  %s7 = sld [smem:[#allocation0]]
  $region50: #{tpu_custom_call.1} parent=0
    _
  %s9 = ssub.s32 1, %s7
  %s10 = scalar_select 0, %s9, %s7
  $region1: #{tpu_custom_call.1} parent=0
    #allocation4 [shape = 'u8[18432]{0}', space=vmem, size = 0x4800, scoped, tag = 'input window, operand 0, single buffered']
    #allocation5 [shape = 's32[1]{0}', space=sflag, size = 0x4, scoped, tag = 'scoped memory for tpu_custom_call.1']
    #allocation6 [shape = 's32[1]{0}', space=sflag, size = 0x4, scoped, tag = 'scoped memory for tpu_custom_call.1']
    #allocation7 [shape = 'u8[131072]{0}', space=vmem, size = 0x20000, scoped, tag = 'input window, operand 1, single buffered']
    #allocation8 [shape = 's32[1]{0}', space=sflag, size = 0x4, scoped, tag = 'scoped memory for tpu_custom_call.1']
    #allocation9 [shape = 'u8[131072]{0}', space=vmem, size = 0x20000, scoped, tag = 'input window, operand 2, single buffered']
    #allocation10 [shape = 'u8[32768]{0}', space=vmem, size = 0x8000, scoped, tag = 'input window, operand 4, single buffered']
    #allocation11 [shape = 's32[1]{0}', space=sflag, size = 0x4, scoped, tag = 'scoped memory for tpu_custom_call.1']
    #allocation12 [shape = 'u8[36864]{0}', space=vmem, size = 0x9000, scoped, tag = 'output window, operand 0, single buffered']
    %11 = vsyncpa [#allocation5], 0
    %12 = vsyncpa [#allocation8], 0
    %13 = vsyncpa [#allocation11], 0
    %14 = vsyncpa [#allocation6], 0
    // Predicated region
    $region2: #{tpu_custom_call.1} parent=1 // pred_check
      _
    $region3: #{tpu_custom_call.1} parent=1 // pred_check_branch
      %16 = sbr.rel (0) target = $region5
    $region4: #{tpu_custom_call.1} parent=1 // pred_region
      %s18 = ssub.s32 576, 576
      %19 = vsyncadd [#allocation5], %s18
      %s20 = sshll.u32 [#allocation4], 4
      %s21 = int_to_ptr.vmem [resolvable:$true] %s20
      %26 = dma.hbm_to_vmem [thread:$0]  %s0, 576, %s21, [#allocation5], 64, 64, 4
    $region5: #{tpu_custom_call.1} parent=1 // pred_fallthru
      _
    // Predicated region
    $region6: #{tpu_custom_call.1} parent=1 // pred_check
      _
    $region7: #{tpu_custom_call.1} parent=1 // pred_check_branch
      %28 = sbr.rel (0) target = $region9
    $region8: #{tpu_custom_call.1} parent=1 // pred_region
      %s30 = ssub.s32 4096, 4096
      %31 = vsyncadd [#allocation8], %s30
      %s32 = sshll.u32 [#allocation7], 4
      %s33 = int_to_ptr.vmem [resolvable:$true] %s32
      %38 = dma.hbm_to_vmem [thread:$0]  %s1, 4096, %s33, [#allocation8], 256, 256, 16
    $region9: #{tpu_custom_call.1} parent=1 // pred_fallthru
      _
    // Predicated region
    $region10: #{tpu_custom_call.1} parent=1 // pred_check
      _
    $region11: #{tpu_custom_call.1} parent=1 // pred_check_branch
      %40 = sbr.rel (0) target = $region13
    $region12: #{tpu_custom_call.1} parent=1 // pred_region
      %s42 = ssub.s32 4096, 4096
      %43 = vsyncadd [#allocation8], %s42
      %s44 = sshll.u32 [#allocation9], 4
      %s45 = int_to_ptr.vmem [resolvable:$true] %s44
      %50 = dma.hbm_to_vmem [thread:$0]  %s2, 4096, %s45, [#allocation8], 256, 256, 16
    $region13: #{tpu_custom_call.1} parent=1 // pred_fallthru
      _
    // Predicated region
    $region14: #{tpu_custom_call.1} parent=1 // pred_check
      _
    $region15: #{tpu_custom_call.1} parent=1 // pred_check_branch
      %52 = sbr.rel (0) target = $region17
    $region16: #{tpu_custom_call.1} parent=1 // pred_region
      _
    $region17: #{tpu_custom_call.1} parent=1 // pred_fallthru
      _
    // Predicated region
    $region18: #{tpu_custom_call.1} parent=1 // pred_check
      _
    $region19: #{tpu_custom_call.1} parent=1 // pred_check_branch
      %54 = sbr.rel (0) target = $region21
    $region20: #{tpu_custom_call.1} parent=1 // pred_region
      %s56 = ssub.s32 1024, 1024
      %57 = vsyncadd [#allocation11], %s56
      %s58 = sshll.u32 [#allocation10], 4
      %s59 = int_to_ptr.vmem [resolvable:$true] %s58
      %64 = dma.hbm_to_vmem [thread:$0]  %s4, 1024, %s59, [#allocation11], 64, 64, 4
    $region21: #{tpu_custom_call.1} parent=1 // pred_fallthru
      _
    // Predicated region
    $region22: #{tpu_custom_call.1} parent=1 // pred_check
      _
    $region23: #{tpu_custom_call.1} parent=1 // pred_check_branch
      %66 = sbr.rel (0) target = $region25
    $region24: #{tpu_custom_call.1} parent=1 // pred_region
      _
    $region25: #{tpu_custom_call.1} parent=1 // pred_fallthru
      _
    // Predicated region
    $region26: #{tpu_custom_call.1} parent=1 // pred_check
      _
    $region27: #{tpu_custom_call.1} parent=1 // pred_check_branch
      %68 = sbr.rel (0) target = $region29
    $region28: #{tpu_custom_call.1} parent=1 // pred_region
      %69 = dma.done [#allocation5], 576
    $region29: #{tpu_custom_call.1} parent=1 // pred_fallthru
      _
    // Predicated region
    $region30: #{tpu_custom_call.1} parent=1 // pred_check
      _
    $region31: #{tpu_custom_call.1} parent=1 // pred_check_branch
      %71 = sbr.rel (0) target = $region33
    $region32: #{tpu_custom_call.1} parent=1 // pred_region
      %72 = dma.done [#allocation8], 4096
    $region33: #{tpu_custom_call.1} parent=1 // pred_fallthru
      _
    // Predicated region
    $region34: #{tpu_custom_call.1} parent=1 // pred_check
      _
    $region35: #{tpu_custom_call.1} parent=1 // pred_check_branch
      %74 = sbr.rel (0) target = $region37
    $region36: #{tpu_custom_call.1} parent=1 // pred_region
      %75 = dma.done [#allocation8], 4096
    $region37: #{tpu_custom_call.1} parent=1 // pred_fallthru
      _
    // Predicated region
    $region38: #{tpu_custom_call.1} parent=1 // pred_check
      _
    $region39: #{tpu_custom_call.1} parent=1 // pred_check_branch
      %77 = sbr.rel (0) target = $region41
    $region40: #{tpu_custom_call.1} parent=1 // pred_region
      %78 = dma.done [#allocation11], 1024
    $region41: #{tpu_custom_call.1} parent=1 // pred_fallthru
      _
    %v80 = vld [vmem:[#allocation4] sm:$0xf]
    %v81 = vld [vmem:[#allocation4 + $0x4] sm:$0xf]
    %v82 = vld [vmem:[#allocation4 + $0x8] sm:$0xf]
    %v83 = vld [vmem:[#allocation4 + $0xc] sm:$0xf]
    %v84 = vld [vmem:[#allocation4 + $0x10] sm:$0xf]
    %v85 = vld [vmem:[#allocation4 + $0x14] sm:$0xf]
    %v86 = vld [vmem:[#allocation4 + $0x18] sm:$0xf]
    %v87 = vld [vmem:[#allocation4 + $0x1c] sm:$0xf]
    %v88 = vld [vmem:[#allocation4 + $0x20] sm:$0xf]
    %v89 = vld [vmem:[#allocation7] sm:$0xff]
    %v90 = vld [vmem:[#allocation7 + $0x8] sm:$0xff]
    %v91 = vld [vmem:[#allocation7 + $0x10] sm:$0xff]
    %v92 = vld [vmem:[#allocation7 + $0x18] sm:$0xff]
    %v93 = vld [vmem:[#allocation7 + $0x20] sm:$0xff]
    %v94 = vld [vmem:[#allocation7 + $0x28] sm:$0xff]
    %v95 = vld [vmem:[#allocation7 + $0x30] sm:$0xff]
    %v96 = vld [vmem:[#allocation7 + $0x38] sm:$0xff]
    %v97 = vld [vmem:[#allocation7 + $0x40] sm:$0xff]
    %v98 = vld [vmem:[#allocation7 + $0x48] sm:$0xff]
    %v99 = vld [vmem:[#allocation7 + $0x50] sm:$0xff]
    %v100 = vld [vmem:[#allocation7 + $0x58] sm:$0xff]
    %v101 = vld [vmem:[#allocation7 + $0x60] sm:$0xff]
    %v102 = vld [vmem:[#allocation7 + $0x68] sm:$0xff]
    %v103 = vld [vmem:[#allocation7 + $0x70] sm:$0xff]
    %v104 = vld [vmem:[#allocation7 + $0x78] sm:$0xff]
    %v105 = vld [vmem:[#allocation7 + $0x80] sm:$0xff]
    %v106 = vld [vmem:[#allocation7 + $0x88] sm:$0xff]
    %v107 = vld [vmem:[#allocation7 + $0x90] sm:$0xff]
    %v108 = vld [vmem:[#allocation7 + $0x98] sm:$0xff]
    %v109 = vld [vmem:[#allocation7 + $0xa0] sm:$0xff]
    %v110 = vld [vmem:[#allocation7 + $0xa8] sm:$0xff]
    %v111 = vld [vmem:[#allocation7 + $0xb0] sm:$0xff]
    %v112 = vld [vmem:[#allocation7 + $0xb8] sm:$0xff]
    %v113 = vld [vmem:[#allocation7 + $0xc0] sm:$0xff]
    %v114 = vld [vmem:[#allocation7 + $0xc8] sm:$0xff]
    %v115 = vld [vmem:[#allocation7 + $0xd0] sm:$0xff]
    %v116 = vld [vmem:[#allocation7 + $0xd8] sm:$0xff]
    %v117 = vld [vmem:[#allocation7 + $0xe0] sm:$0xff]
    %v118 = vld [vmem:[#allocation7 + $0xe8] sm:$0xff]
    %v119 = vld [vmem:[#allocation7 + $0xf0] sm:$0xff]
    %v120 = vld [vmem:[#allocation7 + $0xf8] sm:$0xff]
    %v121 = vld [vmem:[%s3] sm:$0xf]
    %v123 = vlaneseq
    %v124 = vshrl.u32 %v123, 7
    %v125 = vsub.s32 0, %v124
    %v126 = vrot.slane %v121, %v125
    %v127 = vlaneseq
    %v128 = vshrl.u32 %v127, 7
    %v129 = vsub.s32 1, %v128
    %v130 = vrot.slane %v121, %v129
    %v131 = vlaneseq
    %v132 = vshrl.u32 %v131, 7
    %v133 = vsub.s32 2, %v132
    %v134 = vrot.slane %v121, %v133
    %v135 = vlaneseq
    %v136 = vshrl.u32 %v135, 7
    %v137 = vsub.s32 3, %v136
    %v138 = vrot.slane %v121, %v137
    %v152 = vunpack.c.l.b16 %v80
    %v153 = vunpack.c.l.b16 %v81
    %v154 = vunpack.c.l.b16 %v82
    %v155 = vunpack.c.l.b16 %v83
    %v156 = vunpack.c.l.b16 %v84
    %v157 = vunpack.c.l.b16 %v85
    %v158 = vunpack.c.l.b16 %v86
    %v159 = vunpack.c.l.b16 %v87
    %v160 = vunpack.c.l.b16 %v88
    %v161 = vpack.c.b16 %v153, %v152
    %v162 = vpack.c.b16 %v155, %v154
    %v163 = vpack.c.b16 %v157, %v156
    %v164 = vpack.c.b16 %v159, %v158
    %v165 = vpack.c.b16 %v160, %v160
    %v203 = vunpack.c.l.b16 %v89
    %v204 = vunpack.c.h.b16 %v89
    %v205 = vunpack.c.l.b16 %v90
    %v206 = vunpack.c.h.b16 %v90
    %v207 = vunpack.c.l.b16 %v91
    %v208 = vunpack.c.h.b16 %v91
    %v209 = vunpack.c.l.b16 %v92
    %v210 = vunpack.c.h.b16 %v92
    %v211 = vunpack.c.l.b16 %v93
    %v212 = vunpack.c.h.b16 %v93
    %v213 = vunpack.c.l.b16 %v94
    %v214 = vunpack.c.h.b16 %v94
    %v215 = vunpack.c.l.b16 %v95
    %v216 = vunpack.c.h.b16 %v95
    %v217 = vunpack.c.l.b16 %v96
    %v218 = vunpack.c.h.b16 %v96
    %v219 = vunpack.c.l.b16 %v97
    %v220 = vunpack.c.h.b16 %v97
    %v221 = vunpack.c.l.b16 %v98
    %v222 = vunpack.c.h.b16 %v98
    %v223 = vunpack.c.l.b16 %v99
    %v224 = vunpack.c.h.b16 %v99
    %v225 = vunpack.c.l.b16 %v100
    %v226 = vunpack.c.h.b16 %v100
    %v227 = vunpack.c.l.b16 %v101
    %v228 = vunpack.c.h.b16 %v101
    %v229 = vunpack.c.l.b16 %v102
    %v230 = vunpack.c.h.b16 %v102
    %v231 = vunpack.c.l.b16 %v103
    %v232 = vunpack.c.h.b16 %v103
    %v233 = vunpack.c.l.b16 %v104
    %v234 = vunpack.c.h.b16 %v104
    %v235 = vunpack.c.l.b16 %v105
    %v236 = vunpack.c.h.b16 %v105
    %v237 = vunpack.c.l.b16 %v106
    %v238 = vunpack.c.h.b16 %v106
    %v239 = vunpack.c.l.b16 %v107
    %v240 = vunpack.c.h.b16 %v107
    %v241 = vunpack.c.l.b16 %v108
    %v242 = vunpack.c.h.b16 %v108
    %v243 = vunpack.c.l.b16 %v109
    %v244 = vunpack.c.h.b16 %v109
    %v245 = vunpack.c.l.b16 %v110
    %v246 = vunpack.c.h.b16 %v110
    %v247 = vunpack.c.l.b16 %v111
    %v248 = vunpack.c.h.b16 %v111
    %v249 = vunpack.c.l.b16 %v112
    %v250 = vunpack.c.h.b16 %v112
    %v251 = vunpack.c.l.b16 %v113
    %v252 = vunpack.c.h.b16 %v113
    %v253 = vunpack.c.l.b16 %v114
    %v254 = vunpack.c.h.b16 %v114
    %v255 = vunpack.c.l.b16 %v115
    %v256 = vunpack.c.h.b16 %v115
    %v257 = vunpack.c.l.b16 %v116
    %v258 = vunpack.c.h.b16 %v116
    %v259 = vunpack.c.l.b16 %v117
    %v260 = vunpack.c.h.b16 %v117
    %v261 = vunpack.c.l.b16 %v118
    %v262 = vunpack.c.h.b16 %v118
    %v263 = vunpack.c.l.b16 %v119
    %v264 = vunpack.c.h.b16 %v119
    %v265 = vunpack.c.l.b16 %v120
    %v266 = vunpack.c.h.b16 %v120
    %v267 = vpack.c.b16 %v207, %v203
    %v268 = vpack.c.b16 %v208, %v204
    %v269 = vpack.c.b16 %v209, %v205
    %v270 = vpack.c.b16 %v210, %v206
    %v271 = vpack.c.b16 %v215, %v211
    %v272 = vpack.c.b16 %v216, %v212
    %v273 = vpack.c.b16 %v217, %v213
    %v274 = vpack.c.b16 %v218, %v214
    %v275 = vpack.c.b16 %v223, %v219
    %v276 = vpack.c.b16 %v224, %v220
    %v277 = vpack.c.b16 %v225, %v221
    %v278 = vpack.c.b16 %v226, %v222
    %v279 = vpack.c.b16 %v231, %v227
    %v280 = vpack.c.b16 %v232, %v228
    %v281 = vpack.c.b16 %v233, %v229
    %v282 = vpack.c.b16 %v234, %v230
    %v283 = vpack.c.b16 %v239, %v235
    %v284 = vpack.c.b16 %v240, %v236
    %v285 = vpack.c.b16 %v241, %v237
    %v286 = vpack.c.b16 %v242, %v238
    %v287 = vpack.c.b16 %v247, %v243
    %v288 = vpack.c.b16 %v248, %v244
    %v289 = vpack.c.b16 %v249, %v245
    %v290 = vpack.c.b16 %v250, %v246
    %v291 = vpack.c.b16 %v255, %v251
    %v292 = vpack.c.b16 %v256, %v252
    %v293 = vpack.c.b16 %v257, %v253
    %v294 = vpack.c.b16 %v258, %v254
    %v295 = vpack.c.b16 %v263, %v259
    %v296 = vpack.c.b16 %v264, %v260
    %v297 = vpack.c.b16 %v265, %v261
    %v298 = vpack.c.b16 %v266, %v262
    %331 = vmatprep.subr.bf16.mxu0 %v268
    %332 = vmatpush1.bf16.msra.mxu0 %v267
    %333 = vmatprep.subr.bf16.mxu0 %v272
    %334 = vmatpush1.bf16.msra.mxu0 %v271
    %335 = vmatprep.subr.bf16.mxu0 %v276
    %336 = vmatpush1.bf16.msra.mxu0 %v275
    %337 = vmatprep.subr.bf16.mxu0 %v280
    %338 = vmatpush1.bf16.msra.mxu0 %v279
    %339 = vmatprep.subr.bf16.mxu0 %v284
    %340 = vmatpush1.bf16.msra.mxu0 %v283
    %341 = vmatprep.subr.bf16.mxu0 %v288
    %342 = vmatpush1.bf16.msra.mxu0 %v287
    %343 = vmatprep.subr.bf16.mxu0 %v292
    %344 = vmatpush1.bf16.msra.mxu0 %v291
    %345 = vmatprep.subr.bf16.mxu0 %v296
    %346 = vmatpush1.bf16.msra.mxu0 %v295
    %347 = vmatprep.subr.bf16.mxu0 0
    %348 = vmatpush1.bf16.msra.mxu0 0
    %349 = vmatprep.subr.bf16.mxu0 0
    %350 = vmatpush1.bf16.msra.mxu0 0
    %351 = vmatprep.subr.bf16.mxu0 0
    %352 = vmatpush1.bf16.msra.mxu0 0
    %353 = vmatprep.subr.bf16.mxu0 0
    %354 = vmatpush1.bf16.msra.mxu0 0
    %355 = vmatprep.subr.bf16.mxu0 0
    %356 = vmatpush1.bf16.msra.mxu0 0
    %357 = vmatprep.subr.bf16.mxu0 0
    %358 = vmatpush1.bf16.msra.mxu0 0
    %359 = vmatprep.subr.bf16.mxu0 0
    %360 = vmatpush1.bf16.msra.mxu0 0
    %361 = vmatprep.subr.bf16.mxu0 0
    %362 = vmatpush1.bf16.msra.mxu0 0
    %363 = vmatprep.mubr.bf16.mxu0 0
    %364 = vmatmul.mubr.bf16.gmra.mrb[0].mxu0 %v161
    %v365 = vpop.f32.mrb[0].mxu0
    %v366 = vadd.f32 %v126, %v365
    %v367 = vpop.f32.mrb[0].mxu0
    %v368 = vadd.f32 %v130, %v367
    %v369 = vpop.f32.mrb[0].mxu0
    %v370 = vadd.f32 %v126, %v369
    %v371 = vpop.f32.mrb[0].mxu0
    %v372 = vadd.f32 %v130, %v371
    %373 = vmatprep.mubr.bf16.mxu0 0
    %374 = vmatmul.mubr.bf16.gmra.mrb[0].mxu0 %v162
    %v375 = vpop.f32.mrb[0].mxu0
    %v376 = vadd.f32 %v126, %v375
    %v377 = vpop.f32.mrb[0].mxu0
    %v378 = vadd.f32 %v130, %v377
    %v379 = vpop.f32.mrb[0].mxu0
    %v380 = vadd.f32 %v126, %v379
    %v381 = vpop.f32.mrb[0].mxu0
    %v382 = vadd.f32 %v130, %v381
    %383 = vmatprep.mubr.bf16.mxu0 0
    %384 = vmatmul.mubr.bf16.gmra.mrb[0].mxu0 %v163
    %v385 = vpop.f32.mrb[0].mxu0
    %v386 = vadd.f32 %v126, %v385
    %v387 = vpop.f32.mrb[0].mxu0
    %v388 = vadd.f32 %v130, %v387
    %v389 = vpop.f32.mrb[0].mxu0
    %v390 = vadd.f32 %v126, %v389
    %v391 = vpop.f32.mrb[0].mxu0
    %v392 = vadd.f32 %v130, %v391
    %393 = vmatprep.mubr.bf16.mxu0 0
    %394 = vmatmul.mubr.bf16.gmra.mrb[0].mxu0 %v164
    %v395 = vpop.f32.mrb[0].mxu0
    %v396 = vadd.f32 %v126, %v395
    %v397 = vpop.f32.mrb[0].mxu0
    %v398 = vadd.f32 %v130, %v397
    %v399 = vpop.f32.mrb[0].mxu0
    %v400 = vadd.f32 %v126, %v399
    %v401 = vpop.f32.mrb[0].mxu0
    %v402 = vadd.f32 %v130, %v401
    %403 = vmatprep.mubr.bf16.mxu0 0
    %404 = vmatmul.mubr.bf16.gmra.mrb[0].mxu0 %v165
    %v405 = vpop.f32.mrb[0].mxu0
    %v406 = vadd.f32 %v126, %v405
    %v407 = vpop.f32.mrb[0].mxu0
    %v408 = vadd.f32 %v130, %v407
    %v409 = vpop.f32.mrb[0].mxu0
    %v410 = vpop.f32.mrb[0].mxu0
    %411 = vdwg.mxu0
    %412 = vmatprep.subr.bf16.mxu0 %v270
    %413 = vmatpush1.bf16.msra.mxu0 %v269
    %414 = vmatprep.subr.bf16.mxu0 %v274
    %415 = vmatpush1.bf16.msra.mxu0 %v273
    %416 = vmatprep.subr.bf16.mxu0 %v278
    %417 = vmatpush1.bf16.msra.mxu0 %v277
    %418 = vmatprep.subr.bf16.mxu0 %v282
    %419 = vmatpush1.bf16.msra.mxu0 %v281
    %420 = vmatprep.subr.bf16.mxu0 %v286
    %421 = vmatpush1.bf16.msra.mxu0 %v285
    %422 = vmatprep.subr.bf16.mxu0 %v290
    %423 = vmatpush1.bf16.msra.mxu0 %v289
    %424 = vmatprep.subr.bf16.mxu0 %v294
    %425 = vmatpush1.bf16.msra.mxu0 %v293
    %426 = vmatprep.subr.bf16.mxu0 %v298
    %427 = vmatpush1.bf16.msra.mxu0 %v297
    %428 = vmatprep.subr.bf16.mxu0 0
    %429 = vmatpush1.bf16.msra.mxu0 0
    %430 = vmatprep.subr.bf16.mxu0 0
    %431 = vmatpush1.bf16.msra.mxu0 0
    %432 = vmatprep.subr.bf16.mxu0 0
    %433 = vmatpush1.bf16.msra.mxu0 0
    %434 = vmatprep.subr.bf16.mxu0 0
    %435 = vmatpush1.bf16.msra.mxu0 0
    %436 = vmatprep.subr.bf16.mxu0 0
    %437 = vmatpush1.bf16.msra.mxu0 0
    %438 = vmatprep.subr.bf16.mxu0 0
    %439 = vmatpush1.bf16.msra.mxu0 0
    %440 = vmatprep.subr.bf16.mxu0 0
    %441 = vmatpush1.bf16.msra.mxu0 0
    %442 = vmatprep.subr.bf16.mxu0 0
    %443 = vmatpush1.bf16.msra.mxu0 0
    %444 = vmatprep.mubr.bf16.mxu0 0
    %445 = vmatmul.mubr.bf16.gmra.mrb[0].mxu0 %v161
    %v446 = vpop.f32.mrb[0].mxu0
    %v447 = vadd.f32 %v134, %v446
    %v448 = vpop.f32.mrb[0].mxu0
    %v449 = vadd.f32 %v138, %v448
    %v450 = vpop.f32.mrb[0].mxu0
    %v451 = vadd.f32 %v134, %v450
    %v452 = vpop.f32.mrb[0].mxu0
    %v453 = vadd.f32 %v138, %v452
    %454 = vmatprep.mubr.bf16.mxu0 0
    %455 = vmatmul.mubr.bf16.gmra.mrb[0].mxu0 %v162
    %v456 = vpop.f32.mrb[0].mxu0
    %v457 = vadd.f32 %v134, %v456
    %v458 = vpop.f32.mrb[0].mxu0
    %v459 = vadd.f32 %v138, %v458
    %v460 = vpop.f32.mrb[0].mxu0
    %v461 = vadd.f32 %v134, %v460
    %v462 = vpop.f32.mrb[0].mxu0
    %v463 = vadd.f32 %v138, %v462
    %464 = vmatprep.mubr.bf16.mxu0 0
    %465 = vmatmul.mubr.bf16.gmra.mrb[0].mxu0 %v163
    %v466 = vpop.f32.mrb[0].mxu0
    %v467 = vadd.f32 %v134, %v466
    %v468 = vpop.f32.mrb[0].mxu0
    %v469 = vadd.f32 %v138, %v468
    %v470 = vpop.f32.mrb[0].mxu0
    %v471 = vadd.f32 %v134, %v470
    %v472 = vpop.f32.mrb[0].mxu0
    %v473 = vadd.f32 %v138, %v472
    %474 = vmatprep.mubr.bf16.mxu0 0
    %475 = vmatmul.mubr.bf16.gmra.mrb[0].mxu0 %v164
    %v476 = vpop.f32.mrb[0].mxu0
    %v477 = vadd.f32 %v134, %v476
    %v478 = vpop.f32.mrb[0].mxu0
    %v479 = vadd.f32 %v138, %v478
    %v480 = vpop.f32.mrb[0].mxu0
    %v481 = vadd.f32 %v134, %v480
    %v482 = vpop.f32.mrb[0].mxu0
    %v483 = vadd.f32 %v138, %v482
    %484 = vmatprep.mubr.bf16.mxu0 0
    %485 = vmatmul.mubr.bf16.gmra.mrb[0].mxu0 %v165
    %v486 = vpop.f32.mrb[0].mxu0
    %v487 = vadd.f32 %v134, %v486
    %v488 = vpop.f32.mrb[0].mxu0
    %v489 = vadd.f32 %v138, %v488
    %v490 = vpop.f32.mrb[0].mxu0
    %v491 = vpop.f32.mrb[0].mxu0
    %492 = vdwg.mxu0
    %493 = vst [vmem:[#allocation2] sm:$0xff] %v366
    %494 = vst [vmem:[#allocation2 + $0x8] sm:$0xff] %v368
    %495 = vst [vmem:[#allocation2 + $0x10] sm:$0xff] %v447
    %496 = vst [vmem:[#allocation2 + $0x18] sm:$0xff] %v449
    %497 = vst [vmem:[#allocation2 + $0x20] sm:$0xff] %v370
    %498 = vst [vmem:[#allocation2 + $0x28] sm:$0xff] %v372
    %499 = vst [vmem:[#allocation2 + $0x30] sm:$0xff] %v451
    %500 = vst [vmem:[#allocation2 + $0x38] sm:$0xff] %v453
    %501 = vst [vmem:[#allocation2 + $0x40] sm:$0xff] %v376
    %502 = vst [vmem:[#allocation2 + $0x48] sm:$0xff] %v378
    %503 = vst [vmem:[#allocation2 + $0x50] sm:$0xff] %v457
    %504 = vst [vmem:[#allocation2 + $0x58] sm:$0xff] %v459
    %505 = vst [vmem:[#allocation2 + $0x60] sm:$0xff] %v380
    %506 = vst [vmem:[#allocation2 + $0x68] sm:$0xff] %v382
    %507 = vst [vmem:[#allocation2 + $0x70] sm:$0xff] %v461
    %508 = vst [vmem:[#allocation2 + $0x78] sm:$0xff] %v463
    %509 = vst [vmem:[#allocation2 + $0x80] sm:$0xff] %v386
    %510 = vst [vmem:[#allocation2 + $0x88] sm:$0xff] %v388
    %511 = vst [vmem:[#allocation2 + $0x90] sm:$0xff] %v467
    %512 = vst [vmem:[#allocation2 + $0x98] sm:$0xff] %v469
    %513 = vst [vmem:[#allocation2 + $0xa0] sm:$0xff] %v390
    %514 = vst [vmem:[#allocation2 + $0xa8] sm:$0xff] %v392
    %515 = vst [vmem:[#allocation2 + $0xb0] sm:$0xff] %v471
    %516 = vst [vmem:[#allocation2 + $0xb8] sm:$0xff] %v473
    %517 = vst [vmem:[#allocation2 + $0xc0] sm:$0xff] %v396
    %518 = vst [vmem:[#allocation2 + $0xc8] sm:$0xff] %v398
    %519 = vst [vmem:[#allocation2 + $0xd0] sm:$0xff] %v477
    %520 = vst [vmem:[#allocation2 + $0xd8] sm:$0xff] %v479
    %521 = vst [vmem:[#allocation2 + $0xe0] sm:$0xff] %v400
    %522 = vst [vmem:[#allocation2 + $0xe8] sm:$0xff] %v402
    %523 = vst [vmem:[#allocation2 + $0xf0] sm:$0xff] %v481
    %524 = vst [vmem:[#allocation2 + $0xf8] sm:$0xff] %v483
    %525 = vst [vmem:[#allocation2 + $0x100] sm:$0xff] %v406
    %526 = vst [vmem:[#allocation2 + $0x108] sm:$0xff] %v408
    %527 = vst [vmem:[#allocation2 + $0x110] sm:$0xff] %v487
    %528 = vst [vmem:[#allocation2 + $0x118] sm:$0xff] %v489
    %v529 = vld [vmem:[#allocation9] sm:$0xff]
    %v530 = vld [vmem:[#allocation9 + $0x8] sm:$0xff]
    %v531 = vld [vmem:[#allocation9 + $0x10] sm:$0xff]
    %v532 = vld [vmem:[#allocation9 + $0x18] sm:$0xff]
    %v533 = vld [vmem:[#allocation9 + $0x20] sm:$0xff]
    %v534 = vld [vmem:[#allocation9 + $0x28] sm:$0xff]
    %v535 = vld [vmem:[#allocation9 + $0x30] sm:$0xff]
    %v536 = vld [vmem:[#allocation9 + $0x38] sm:$0xff]
    %v537 = vld [vmem:[#allocation9 + $0x40] sm:$0xff]
    %v538 = vld [vmem:[#allocation9 + $0x48] sm:$0xff]
    %v539 = vld [vmem:[#allocation9 + $0x50] sm:$0xff]
    %v540 = vld [vmem:[#allocation9 + $0x58] sm:$0xff]
    %v541 = vld [vmem:[#allocation9 + $0x60] sm:$0xff]
    %v542 = vld [vmem:[#allocation9 + $0x68] sm:$0xff]
    %v543 = vld [vmem:[#allocation9 + $0x70] sm:$0xff]
    %v544 = vld [vmem:[#allocation9 + $0x78] sm:$0xff]
    %v545 = vld [vmem:[#allocation9 + $0x80] sm:$0xff]
    %v546 = vld [vmem:[#allocation9 + $0x88] sm:$0xff]
    %v547 = vld [vmem:[#allocation9 + $0x90] sm:$0xff]
    %v548 = vld [vmem:[#allocation9 + $0x98] sm:$0xff]
    %v549 = vld [vmem:[#allocation9 + $0xa0] sm:$0xff]
    %v550 = vld [vmem:[#allocation9 + $0xa8] sm:$0xff]
    %v551 = vld [vmem:[#allocation9 + $0xb0] sm:$0xff]
    %v552 = vld [vmem:[#allocation9 + $0xb8] sm:$0xff]
    %v553 = vld [vmem:[#allocation9 + $0xc0] sm:$0xff]
    %v554 = vld [vmem:[#allocation9 + $0xc8] sm:$0xff]
    %v555 = vld [vmem:[#allocation9 + $0xd0] sm:$0xff]
    %v556 = vld [vmem:[#allocation9 + $0xd8] sm:$0xff]
    %v557 = vld [vmem:[#allocation9 + $0xe0] sm:$0xff]
    %v558 = vld [vmem:[#allocation9 + $0xe8] sm:$0xff]
    %v559 = vld [vmem:[#allocation9 + $0xf0] sm:$0xff]
    %v560 = vld [vmem:[#allocation9 + $0xf8] sm:$0xff]
    %v561 = vld [vmem:[#allocation2] sm:$0xff]
    %v562 = vld [vmem:[#allocation2 + $0x8] sm:$0xff]
    %v563 = vld [vmem:[#allocation2 + $0x10] sm:$0xff]
    %v564 = vld [vmem:[#allocation2 + $0x18] sm:$0xff]
    %v597 = vunpack.c.l.b16 %v529
    %v598 = vunpack.c.h.b16 %v529
    %v599 = vunpack.c.l.b16 %v530
    %v600 = vunpack.c.h.b16 %v530
    %v601 = vunpack.c.l.b16 %v531
    %v602 = vunpack.c.h.b16 %v531
    %v603 = vunpack.c.l.b16 %v532
    %v604 = vunpack.c.h.b16 %v532
    %v605 = vunpack.c.l.b16 %v533
    %v606 = vunpack.c.h.b16 %v533
    %v607 = vunpack.c.l.b16 %v534
    %v608 = vunpack.c.h.b16 %v534
    %v609 = vunpack.c.l.b16 %v535
    %v610 = vunpack.c.h.b16 %v535
    %v611 = vunpack.c.l.b16 %v536
    %v612 = vunpack.c.h.b16 %v536
    %v613 = vunpack.c.l.b16 %v537
    %v614 = vunpack.c.h.b16 %v537
    %v615 = vunpack.c.l.b16 %v538
    %v616 = vunpack.c.h.b16 %v538
    %v617 = vunpack.c.l.b16 %v539
    %v618 = vunpack.c.h.b16 %v539
    %v619 = vunpack.c.l.b16 %v540
    %v620 = vunpack.c.h.b16 %v540
    %v621 = vunpack.c.l.b16 %v541
    %v622 = vunpack.c.h.b16 %v541
    %v623 = vunpack.c.l.b16 %v542
    %v624 = vunpack.c.h.b16 %v542
    %v625 = vunpack.c.l.b16 %v543
    %v626 = vunpack.c.h.b16 %v543
    %v627 = vunpack.c.l.b16 %v544
    %v628 = vunpack.c.h.b16 %v544
    %v629 = vunpack.c.l.b16 %v545
    %v630 = vunpack.c.h.b16 %v545
    %v631 = vunpack.c.l.b16 %v546
    %v632 = vunpack.c.h.b16 %v546
    %v633 = vunpack.c.l.b16 %v547
    %v634 = vunpack.c.h.b16 %v547
    %v635 = vunpack.c.l.b16 %v548
    %v636 = vunpack.c.h.b16 %v548
    %v637 = vunpack.c.l.b16 %v549
    %v638 = vunpack.c.h.b16 %v549
    %v639 = vunpack.c.l.b16 %v550
    %v640 = vunpack.c.h.b16 %v550
    %v641 = vunpack.c.l.b16 %v551
    %v642 = vunpack.c.h.b16 %v551
    %v643 = vunpack.c.l.b16 %v552
    %v644 = vunpack.c.h.b16 %v552
    %v645 = vunpack.c.l.b16 %v553
    %v646 = vunpack.c.h.b16 %v553
    %v647 = vunpack.c.l.b16 %v554
    %v648 = vunpack.c.h.b16 %v554
    %v649 = vunpack.c.l.b16 %v555
    %v650 = vunpack.c.h.b16 %v555
    %v651 = vunpack.c.l.b16 %v556
    %v652 = vunpack.c.h.b16 %v556
    %v653 = vunpack.c.l.b16 %v557
    %v654 = vunpack.c.h.b16 %v557
    %v655 = vunpack.c.l.b16 %v558
    %v656 = vunpack.c.h.b16 %v558
    %v657 = vunpack.c.l.b16 %v559
    %v658 = vunpack.c.h.b16 %v559
    %v659 = vunpack.c.l.b16 %v560
    %v660 = vunpack.c.h.b16 %v560
    %v661 = vpack.c.b16 %v601, %v597
    %v662 = vpack.c.b16 %v602, %v598
    %v663 = vpack.c.b16 %v603, %v599
    %v664 = vpack.c.b16 %v604, %v600
    %v665 = vpack.c.b16 %v609, %v605
    %v666 = vpack.c.b16 %v610, %v606
    %v667 = vpack.c.b16 %v611, %v607
    %v668 = vpack.c.b16 %v612, %v608
    %v669 = vpack.c.b16 %v617, %v613
    %v670 = vpack.c.b16 %v618, %v614
    %v671 = vpack.c.b16 %v619, %v615
    %v672 = vpack.c.b16 %v620, %v616
    %v673 = vpack.c.b16 %v625, %v621
    %v674 = vpack.c.b16 %v626, %v622
    %v675 = vpack.c.b16 %v627, %v623
    %v676 = vpack.c.b16 %v628, %v624
    %v677 = vpack.c.b16 %v633, %v629
    %v678 = vpack.c.b16 %v634, %v630
    %v679 = vpack.c.b16 %v635, %v631
    %v680 = vpack.c.b16 %v636, %v632
    %v681 = vpack.c.b16 %v641, %v637
    %v682 = vpack.c.b16 %v642, %v638
    %v683 = vpack.c.b16 %v643, %v639
    %v684 = vpack.c.b16 %v644, %v640
    %v685 = vpack.c.b16 %v649, %v645
    %v686 = vpack.c.b16 %v650, %v646
    %v687 = vpack.c.b16 %v651, %v647
    %v688 = vpack.c.b16 %v652, %v648
    %v689 = vpack.c.b16 %v657, %v653
    %v690 = vpack.c.b16 %v658, %v654
    %v691 = vpack.c.b16 %v659, %v655
    %v692 = vpack.c.b16 %v660, %v656
    %725 = vmatprep.subr.bf16.mxu0 %v662
    %726 = vmatpush1.bf16.msra.mxu0 %v661
    %727 = vmatprep.subr.bf16.mxu0 %v666
    %728 = vmatpush1.bf16.msra.mxu0 %v665
    %729 = vmatprep.subr.bf16.mxu0 %v670
    %730 = vmatpush1.bf16.msra.mxu0 %v669
    %731 = vmatprep.subr.bf16.mxu0 %v674
    %732 = vmatpush1.bf16.msra.mxu0 %v673
    %733 = vmatprep.subr.bf16.mxu0 %v678
    %734 = vmatpush1.bf16.msra.mxu0 %v677
    %735 = vmatprep.subr.bf16.mxu0 %v682
    %736 = vmatpush1.bf16.msra.mxu0 %v681
    %737 = vmatprep.subr.bf16.mxu0 %v686
    %738 = vmatpush1.bf16.msra.mxu0 %v685
    %739 = vmatprep.subr.bf16.mxu0 %v690
    %740 = vmatpush1.bf16.msra.mxu0 %v689
    %741 = vmatprep.subr.bf16.mxu0 0
    %742 = vmatpush1.bf16.msra.mxu0 0
    %743 = vmatprep.subr.bf16.mxu0 0
    %744 = vmatpush1.bf16.msra.mxu0 0
    %745 = vmatprep.subr.bf16.mxu0 0
    %746 = vmatpush1.bf16.msra.mxu0 0
    %747 = vmatprep.subr.bf16.mxu0 0
    %748 = vmatpush1.bf16.msra.mxu0 0
    %749 = vmatprep.subr.bf16.mxu0 0
    %750 = vmatpush1.bf16.msra.mxu0 0
    %751 = vmatprep.subr.bf16.mxu0 0
    %752 = vmatpush1.bf16.msra.mxu0 0
    %753 = vmatprep.subr.bf16.mxu0 0
    %754 = vmatpush1.bf16.msra.mxu0 0
    %755 = vmatprep.subr.bf16.mxu0 0
    %756 = vmatpush1.bf16.msra.mxu0 0
    %757 = vmatprep.mubr.bf16.mxu0 0
    %758 = vmatmul.mubr.bf16.gmra.mrb[0].mxu0 0
    %v759 = vpop.f32.mrb[0].mxu0
    %v760 = vadd.f32 0.0, %v759
    %v761 = vpop.f32.mrb[0].mxu0
    %v762 = vadd.f32 0.0, %v761
    %v763 = vpop.f32.mrb[0].mxu0
    %v764 = vpop.f32.mrb[0].mxu0
    %765 = vdwg.mxu0
    %766 = vmatprep.subr.bf16.mxu0 %v664
    %767 = vmatpush1.bf16.msra.mxu0 %v663
    %768 = vmatprep.subr.bf16.mxu0 %v668
    %769 = vmatpush1.bf16.msra.mxu0 %v667
    %770 = vmatprep.subr.bf16.mxu0 %v672
    %771 = vmatpush1.bf16.msra.mxu0 %v671
    %772 = vmatprep.subr.bf16.mxu0 %v676
    %773 = vmatpush1.bf16.msra.mxu0 %v675
    %774 = vmatprep.subr.bf16.mxu0 %v680
    %775 = vmatpush1.bf16.msra.mxu0 %v679
    %776 = vmatprep.subr.bf16.mxu0 %v684
    %777 = vmatpush1.bf16.msra.mxu0 %v683
    %778 = vmatprep.subr.bf16.mxu0 %v688
    %779 = vmatpush1.bf16.msra.mxu0 %v687
    %780 = vmatprep.subr.bf16.mxu0 %v692
    %781 = vmatpush1.bf16.msra.mxu0 %v691
    %782 = vmatprep.subr.bf16.mxu0 0
    %783 = vmatpush1.bf16.msra.mxu0 0
    %784 = vmatprep.subr.bf16.mxu0 0
    %785 = vmatpush1.bf16.msra.mxu0 0
    %786 = vmatprep.subr.bf16.mxu0 0
    %787 = vmatpush1.bf16.msra.mxu0 0
    %788 = vmatprep.subr.bf16.mxu0 0
    %789 = vmatpush1.bf16.msra.mxu0 0
    %790 = vmatprep.subr.bf16.mxu0 0
    %791 = vmatpush1.bf16.msra.mxu0 0
    %792 = vmatprep.subr.bf16.mxu0 0
    %793 = vmatpush1.bf16.msra.mxu0 0
    %794 = vmatprep.subr.bf16.mxu0 0
    %795 = vmatpush1.bf16.msra.mxu0 0
    %796 = vmatprep.subr.bf16.mxu0 0
    %797 = vmatpush1.bf16.msra.mxu0 0
    %798 = vmatprep.mubr.bf16.mxu0 0
    %799 = vmatmul.mubr.bf16.gmra.mrb[0].mxu0 0
    %v800 = vpop.f32.mrb[0].mxu0
    %v801 = vadd.f32 0.0, %v800
    %v802 = vpop.f32.mrb[0].mxu0
    %v803 = vadd.f32 0.0, %v802
    %v804 = vpop.f32.mrb[0].mxu0
    %v805 = vpop.f32.mrb[0].mxu0
    %806 = vdwg.mxu0
    %v807 = vadd.f32 %v561, %v760
    %v808 = vadd.f32 %v562, %v762
    %v809 = vadd.f32 %v563, %v801
    %v810 = vadd.f32 %v564, %v803
    %v811 = vxor.u32 %v807, 2147483648
    %v812 = vmul.f32 %v811, 1.442695
    %v813 = vpow.pop %v812
    %v814 = vadd.f32 %v813, 1.0
    %v815 = vrcp.pop %v814
    %v816 = vmul.f32 1.0, %v815
    %v817 = vxor.u32 %v808, 2147483648
    %v818 = vmul.f32 %v817, 1.442695
    %v819 = vpow.pop %v818
    %v820 = vadd.f32 %v819, 1.0
    %v821 = vrcp.pop %v820
    %v822 = vmul.f32 1.0, %v821
    %v823 = vtanh.pop %v809
    %v824 = vxor.u32 %v810, 2147483648
    %v825 = vmul.f32 %v824, 1.442695
    %v826 = vpow.pop %v825
    %v827 = vadd.f32 %v826, 1.0
    %v828 = vrcp.pop %v827
    %v829 = vmul.f32 1.0, %v828
    %v830 = vmul.f32 %v822, 0.0
    %v831 = vmul.f32 %v816, %v823
    %v832 = vadd.f32 %v830, %v831
    %v833 = vtanh.pop %v832
    %v834 = vmul.f32 %v829, %v833
    %835 = vst [vmem:[#allocation3] sm:$0xff] %v834
    %v836 = vld [vmem:[#allocation2 + $0x20] sm:$0xff]
    %v837 = vld [vmem:[#allocation2 + $0x28] sm:$0xff]
    %v838 = vld [vmem:[#allocation2 + $0x30] sm:$0xff]
    %v839 = vld [vmem:[#allocation2 + $0x38] sm:$0xff]
    %v840 = vpack.c.bf16 %v834, %v834
    %841 = vmatprep.subr.bf16.mxu0 %v662
    %842 = vmatpush1.bf16.msra.mxu0 %v661
    %843 = vmatprep.subr.bf16.mxu0 %v666
    %844 = vmatpush1.bf16.msra.mxu0 %v665
    %845 = vmatprep.subr.bf16.mxu0 %v670
    %846 = vmatpush1.bf16.msra.mxu0 %v669
    %847 = vmatprep.subr.bf16.mxu0 %v674
    %848 = vmatpush1.bf16.msra.mxu0 %v673
    %849 = vmatprep.subr.bf16.mxu0 %v678
    %850 = vmatpush1.bf16.msra.mxu0 %v677
    %851 = vmatprep.subr.bf16.mxu0 %v682
    %852 = vmatpush1.bf16.msra.mxu0 %v681
    %853 = vmatprep.subr.bf16.mxu0 %v686
    %854 = vmatpush1.bf16.msra.mxu0 %v685
    %855 = vmatprep.subr.bf16.mxu0 %v690
    %856 = vmatpush1.bf16.msra.mxu0 %v689
    %857 = vmatprep.subr.bf16.mxu0 0
    %858 = vmatpush1.bf16.msra.mxu0 0
    %859 = vmatprep.subr.bf16.mxu0 0
    %860 = vmatpush1.bf16.msra.mxu0 0
    %861 = vmatprep.subr.bf16.mxu0 0
    %862 = vmatpush1.bf16.msra.mxu0 0
    %863 = vmatprep.subr.bf16.mxu0 0
    %864 = vmatpush1.bf16.msra.mxu0 0
    %865 = vmatprep.subr.bf16.mxu0 0
    %866 = vmatpush1.bf16.msra.mxu0 0
    %867 = vmatprep.subr.bf16.mxu0 0
    %868 = vmatpush1.bf16.msra.mxu0 0
    %869 = vmatprep.subr.bf16.mxu0 0
    %870 = vmatpush1.bf16.msra.mxu0 0
    %871 = vmatprep.subr.bf16.mxu0 0
    %872 = vmatpush1.bf16.msra.mxu0 0
    %873 = vmatprep.mubr.bf16.mxu0 0
    %874 = vmatmul.mubr.bf16.gmra.mrb[0].mxu0 %v840
    %v875 = vpop.f32.mrb[0].mxu0
    %v876 = vadd.f32 0.0, %v875
    %v877 = vpop.f32.mrb[0].mxu0
    %v878 = vadd.f32 0.0, %v877
    %v879 = vpop.f32.mrb[0].mxu0
    %v880 = vpop.f32.mrb[0].mxu0
    %881 = vdwg.mxu0
    %882 = vmatprep.subr.bf16.mxu0 %v664
    %883 = vmatpush1.bf16.msra.mxu0 %v663
    %884 = vmatprep.subr.bf16.mxu0 %v668
    %885 = vmatpush1.bf16.msra.mxu0 %v667
    %886 = vmatprep.subr.bf16.mxu0 %v672
    %887 = vmatpush1.bf16.msra.mxu0 %v671
    %888 = vmatprep.subr.bf16.mxu0 %v676
    %889 = vmatpush1.bf16.msra.mxu0 %v675
    %890 = vmatprep.subr.bf16.mxu0 %v680
    %891 = vmatpush1.bf16.msra.mxu0 %v679
    %892 = vmatprep.subr.bf16.mxu0 %v684
    %893 = vmatpush1.bf16.msra.mxu0 %v683
    %894 = vmatprep.subr.bf16.mxu0 %v688
    %895 = vmatpush1.bf16.msra.mxu0 %v687
    %896 = vmatprep.subr.bf16.mxu0 %v692
    %897 = vmatpush1.bf16.msra.mxu0 %v691
    %898 = vmatprep.subr.bf16.mxu0 0
    %899 = vmatpush1.bf16.msra.mxu0 0
    %900 = vmatprep.subr.bf16.mxu0 0
    %901 = vmatpush1.bf16.msra.mxu0 0
    %902 = vmatprep.subr.bf16.mxu0 0
    %903 = vmatpush1.bf16.msra.mxu0 0
    %904 = vmatprep.subr.bf16.mxu0 0
    %905 = vmatpush1.bf16.msra.mxu0 0
    %906 = vmatprep.subr.bf16.mxu0 0
    %907 = vmatpush1.bf16.msra.mxu0 0
    %908 = vmatprep.subr.bf16.mxu0 0
    %909 = vmatpush1.bf16.msra.mxu0 0
    %910 = vmatprep.subr.bf16.mxu0 0
    %911 = vmatpush1.bf16.msra.mxu0 0
    %912 = vmatprep.subr.bf16.mxu0 0
    %913 = vmatpush1.bf16.msra.mxu0 0
    %914 = vmatprep.mubr.bf16.mxu0 0
    %915 = vmatmul.mubr.bf16.gmra.mrb[0].mxu0 %v840
    %v916 = vpop.f32.mrb[0].mxu0
    %v917 = vadd.f32 0.0, %v916
    %v918 = vpop.f32.mrb[0].mxu0
    %v919 = vadd.f32 0.0, %v918
    %v920 = vpop.f32.mrb[0].mxu0
    %v921 = vpop.f32.mrb[0].mxu0
    %922 = vdwg.mxu0
    %v923 = vadd.f32 %v836, %v876
    %v924 = vadd.f32 %v837, %v878
    %v925 = vadd.f32 %v838, %v917
    %v926 = vadd.f32 %v839, %v919
    %v927 = vxor.u32 %v923, 2147483648
    %v928 = vmul.f32 %v927, 1.442695
    %v929 = vpow.pop %v928
    %v930 = vadd.f32 %v929, 1.0
    %v931 = vrcp.pop %v930
    %v932 = vmul.f32 1.0, %v931
    %v933 = vxor.u32 %v924, 2147483648
    %v934 = vmul.f32 %v933, 1.442695
    %v935 = vpow.pop %v934
    %v936 = vadd.f32 %v935, 1.0
    %v937 = vrcp.pop %v936
    %v938 = vmul.f32 1.0, %v937
    %v939 = vtanh.pop %v925
    %v940 = vxor.u32 %v926, 2147483648
    %v941 = vmul.f32 %v940, 1.442695
    %v942 = vpow.pop %v941
    %v943 = vadd.f32 %v942, 1.0
    %v944 = vrcp.pop %v943
    %v945 = vmul.f32 1.0, %v944
    %v946 = vmul.f32 %v938, %v832
    %v947 = vmul.f32 %v932, %v939
    %v948 = vadd.f32 %v946, %v947
    %v949 = vtanh.pop %v948
    %v950 = vmul.f32 %v945, %v949
    %951 = vst [vmem:[#allocation3 + $0x8] sm:$0xff] %v950
    %v952 = vld [vmem:[#allocation2 + $0x40] sm:$0xff]
    %v953 = vld [vmem:[#allocation2 + $0x48] sm:$0xff]
    %v954 = vld [vmem:[#allocation2 + $0x50] sm:$0xff]
    %v955 = vld [vmem:[#allocation2 + $0x58] sm:$0xff]
    %v956 = vpack.c.bf16 %v950, %v950
    %957 = vmatprep.subr.bf16.mxu0 %v662
    %958 = vmatpush1.bf16.msra.mxu0 %v661
    %959 = vmatprep.subr.bf16.mxu0 %v666
    %960 = vmatpush1.bf16.msra.mxu0 %v665
    %961 = vmatprep.subr.bf16.mxu0 %v670
    %962 = vmatpush1.bf16.msra.mxu0 %v669
    %963 = vmatprep.subr.bf16.mxu0 %v674
    %964 = vmatpush1.bf16.msra.mxu0 %v673
    %965 = vmatprep.subr.bf16.mxu0 %v678
    %966 = vmatpush1.bf16.msra.mxu0 %v677
    %967 = vmatprep.subr.bf16.mxu0 %v682
    %968 = vmatpush1.bf16.msra.mxu0 %v681
    %969 = vmatprep.subr.bf16.mxu0 %v686
    %970 = vmatpush1.bf16.msra.mxu0 %v685
    %971 = vmatprep.subr.bf16.mxu0 %v690
    %972 = vmatpush1.bf16.msra.mxu0 %v689
    %973 = vmatprep.subr.bf16.mxu0 0
    %974 = vmatpush1.bf16.msra.mxu0 0
    %975 = vmatprep.subr.bf16.mxu0 0
    %976 = vmatpush1.bf16.msra.mxu0 0
    %977 = vmatprep.subr.bf16.mxu0 0
    %978 = vmatpush1.bf16.msra.mxu0 0
    %979 = vmatprep.subr.bf16.mxu0 0
    %980 = vmatpush1.bf16.msra.mxu0 0
    %981 = vmatprep.subr.bf16.mxu0 0
    %982 = vmatpush1.bf16.msra.mxu0 0
    %983 = vmatprep.subr.bf16.mxu0 0
    %984 = vmatpush1.bf16.msra.mxu0 0
    %985 = vmatprep.subr.bf16.mxu0 0
    %986 = vmatpush1.bf16.msra.mxu0 0
    %987 = vmatprep.subr.bf16.mxu0 0
    %988 = vmatpush1.bf16.msra.mxu0 0
    %989 = vmatprep.mubr.bf16.mxu0 0
    %990 = vmatmul.mubr.bf16.gmra.mrb[0].mxu0 %v956
    %v991 = vpop.f32.mrb[0].mxu0
    %v992 = vadd.f32 0.0, %v991
    %v993 = vpop.f32.mrb[0].mxu0
    %v994 = vadd.f32 0.0, %v993
    %v995 = vpop.f32.mrb[0].mxu0
    %v996 = vpop.f32.mrb[0].mxu0
    %997 = vdwg.mxu0
    %998 = vmatprep.subr.bf16.mxu0 %v664
    %999 = vmatpush1.bf16.msra.mxu0 %v663
    %1000 = vmatprep.subr.bf16.mxu0 %v668
    %1001 = vmatpush1.bf16.msra.mxu0 %v667
    %1002 = vmatprep.subr.bf16.mxu0 %v672
    %1003 = vmatpush1.bf16.msra.mxu0 %v671
    %1004 = vmatprep.subr.bf16.mxu0 %v676
    %1005 = vmatpush1.bf16.msra.mxu0 %v675
    %1006 = vmatprep.subr.bf16.mxu0 %v680
    %1007 = vmatpush1.bf16.msra.mxu0 %v679
    %1008 = vmatprep.subr.bf16.mxu0 %v684
    %1009 = vmatpush1.bf16.msra.mxu0 %v683
    %1010 = vmatprep.subr.bf16.mxu0 %v688
    %1011 = vmatpush1.bf16.msra.mxu0 %v687
    %1012 = vmatprep.subr.bf16.mxu0 %v692
    %1013 = vmatpush1.bf16.msra.mxu0 %v691
    %1014 = vmatprep.subr.bf16.mxu0 0
    %1015 = vmatpush1.bf16.msra.mxu0 0
    %1016 = vmatprep.subr.bf16.mxu0 0
    %1017 = vmatpush1.bf16.msra.mxu0 0
    %1018 = vmatprep.subr.bf16.mxu0 0
    %1019 = vmatpush1.bf16.msra.mxu0 0
    %1020 = vmatprep.subr.bf16.mxu0 0
    %1021 = vmatpush1.bf16.msra.mxu0 0
    %1022 = vmatprep.subr.bf16.mxu0 0
    %1023 = vmatpush1.bf16.msra.mxu0 0
    %1024 = vmatprep.subr.bf16.mxu0 0
    %1025 = vmatpush1.bf16.msra.mxu0 0
    %1026 = vmatprep.subr.bf16.mxu0 0
    %1027 = vmatpush1.bf16.msra.mxu0 0
    %1028 = vmatprep.subr.bf16.mxu0 0
    %1029 = vmatpush1.bf16.msra.mxu0 0
    %1030 = vmatprep.mubr.bf16.mxu0 0
    %1031 = vmatmul.mubr.bf16.gmra.mrb[0].mxu0 %v956
    %v1032 = vpop.f32.mrb[0].mxu0
    %v1033 = vadd.f32 0.0, %v1032
    %v1034 = vpop.f32.mrb[0].mxu0
    %v1035 = vadd.f32 0.0, %v1034
    %v1036 = vpop.f32.mrb[0].mxu0
    %v1037 = vpop.f32.mrb[0].mxu0
    %1038 = vdwg.mxu0
    %v1039 = vadd.f32 %v952, %v992
    %v1040 = vadd.f32 %v953, %v994
    %v1041 = vadd.f32 %v954, %v1033
    %v1042 = vadd.f32 %v955, %v1035
    %v1043 = vxor.u32 %v1039, 2147483648
    %v1044 = vmul.f32 %v1043, 1.442695
    %v1045 = vpow.pop %v1044
    %v1046 = vadd.f32 %v1045, 1.0
    %v1047 = vrcp.pop %v1046
    %v1048 = vmul.f32 1.0, %v1047
    %v1049 = vxor.u32 %v1040, 2147483648
    %v1050 = vmul.f32 %v1049, 1.442695
    %v1051 = vpow.pop %v1050
    %v1052 = vadd.f32 %v1051, 1.0
    %v1053 = vrcp.pop %v1052
    %v1054 = vmul.f32 1.0, %v1053
    %v1055 = vtanh.pop %v1041
    %v1056 = vxor.u32 %v1042, 2147483648
    %v1057 = vmul.f32 %v1056, 1.442695
    %v1058 = vpow.pop %v1057
    %v1059 = vadd.f32 %v1058, 1.0
    %v1060 = vrcp.pop %v1059
    %v1061 = vmul.f32 1.0, %v1060
    %v1062 = vmul.f32 %v1054, %v948
    %v1063 = vmul.f32 %v1048, %v1055
    %v1064 = vadd.f32 %v1062, %v1063
    %v1065 = vtanh.pop %v1064
    %v1066 = vmul.f32 %v1061, %v1065
    %1067 = vst [vmem:[#allocation3 + $0x10] sm:$0xff] %v1066
    %v1068 = vld [vmem:[#allocation2 + $0x60] sm:$0xff]
    %v1069 = vld [vmem:[#allocation2 + $0x68] sm:$0xff]
    %v1070 = vld [vmem:[#allocation2 + $0x70] sm:$0xff]
    %v1071 = vld [vmem:[#allocation2 + $0x78] sm:$0xff]
    %v1072 = vpack.c.bf16 %v1066, %v1066
    %1073 = vmatprep.subr.bf16.mxu0 %v662
    %1074 = vmatpush1.bf16.msra.mxu0 %v661
    %1075 = vmatprep.subr.bf16.mxu0 %v666
    %1076 = vmatpush1.bf16.msra.mxu0 %v665
    %1077 = vmatprep.subr.bf16.mxu0 %v670
    %1078 = vmatpush1.bf16.msra.mxu0 %v669
    %1079 = vmatprep.subr.bf16.mxu0 %v674
    %1080 = vmatpush1.bf16.msra.mxu0 %v673
    %1081 = vmatprep.subr.bf16.mxu0 %v678
    %1082 = vmatpush1.bf16.msra.mxu0 %v677
    %1083 = vmatprep.subr.bf16.mxu0 %v682
    %1084 = vmatpush1.bf16.msra.mxu0 %v681
    %1085 = vmatprep.subr.bf16.mxu0 %v686
    %1086 = vmatpush1.bf16.msra.mxu0 %v685
    %1087 = vmatprep.subr.bf16.mxu0 %v690
    %1088 = vmatpush1.bf16.msra.mxu0 %v689
    %1089 = vmatprep.subr.bf16.mxu0 0
    %1090 = vmatpush1.bf16.msra.mxu0 0
    %1091 = vmatprep.subr.bf16.mxu0 0
    %1092 = vmatpush1.bf16.msra.mxu0 0
    %1093 = vmatprep.subr.bf16.mxu0 0
    %1094 = vmatpush1.bf16.msra.mxu0 0
    %1095 = vmatprep.subr.bf16.mxu0 0
    %1096 = vmatpush1.bf16.msra.mxu0 0
    %1097 = vmatprep.subr.bf16.mxu0 0
    %1098 = vmatpush1.bf16.msra.mxu0 0
    %1099 = vmatprep.subr.bf16.mxu0 0
    %1100 = vmatpush1.bf16.msra.mxu0 0
    %1101 = vmatprep.subr.bf16.mxu0 0
    %1102 = vmatpush1.bf16.msra.mxu0 0
    %1103 = vmatprep.subr.bf16.mxu0 0
    %1104 = vmatpush1.bf16.msra.mxu0 0
    %1105 = vmatprep.mubr.bf16.mxu0 0
    %1106 = vmatmul.mubr.bf16.gmra.mrb[0].mxu0 %v1072
    %v1107 = vpop.f32.mrb[0].mxu0
    %v1108 = vadd.f32 0.0, %v1107
    %v1109 = vpop.f32.mrb[0].mxu0
    %v1110 = vadd.f32 0.0, %v1109
    %v1111 = vpop.f32.mrb[0].mxu0
    %v1112 = vpop.f32.mrb[0].mxu0
    %1113 = vdwg.mxu0
    %1114 = vmatprep.subr.bf16.mxu0 %v664
    %1115 = vmatpush1.bf16.msra.mxu0 %v663
    %1116 = vmatprep.subr.bf16.mxu0 %v668
    %1117 = vmatpush1.bf16.msra.mxu0 %v667
    %1118 = vmatprep.subr.bf16.mxu0 %v672
    %1119 = vmatpush1.bf16.msra.mxu0 %v671
    %1120 = vmatprep.subr.bf16.mxu0 %v676
    %1121 = vmatpush1.bf16.msra.mxu0 %v675
    %1122 = vmatprep.subr.bf16.mxu0 %v680
    %1123 = vmatpush1.bf16.msra.mxu0 %v679
    %1124 = vmatprep.subr.bf16.mxu0 %v684
    %1125 = vmatpush1.bf16.msra.mxu0 %v683
    %1126 = vmatprep.subr.bf16.mxu0 %v688
    %1127 = vmatpush1.bf16.msra.mxu0 %v687
    %1128 = vmatprep.subr.bf16.mxu0 %v692
    %1129 = vmatpush1.bf16.msra.mxu0 %v691
    %1130 = vmatprep.subr.bf16.mxu0 0
    %1131 = vmatpush1.bf16.msra.mxu0 0
    %1132 = vmatprep.subr.bf16.mxu0 0
    %1133 = vmatpush1.bf16.msra.mxu0 0
    %1134 = vmatprep.subr.bf16.mxu0 0
    %1135 = vmatpush1.bf16.msra.mxu0 0
    %1136 = vmatprep.subr.bf16.mxu0 0
    %1137 = vmatpush1.bf16.msra.mxu0 0
    %1138 = vmatprep.subr.bf16.mxu0 0
    %1139 = vmatpush1.bf16.msra.mxu0 0
    %1140 = vmatprep.subr.bf16.mxu0 0
    %1141 = vmatpush1.bf16.msra.mxu0 0
    %1142 = vmatprep.subr.bf16.mxu0 0
    %1143 = vmatpush1.bf16.msra.mxu0 0
    %1144 = vmatprep.subr.bf16.mxu0 0
    %1145 = vmatpush1.bf16.msra.mxu0 0
    %1146 = vmatprep.mubr.bf16.mxu0 0
    %1147 = vmatmul.mubr.bf16.gmra.mrb[0].mxu0 %v1072
    %v1148 = vpop.f32.mrb[0].mxu0
    %v1149 = vadd.f32 0.0, %v1148
    %v1150 = vpop.f32.mrb[0].mxu0
    %v1151 = vadd.f32 0.0, %v1150
    %v1152 = vpop.f32.mrb[0].mxu0
    %v1153 = vpop.f32.mrb[0].mxu0
    %1154 = vdwg.mxu0
    %v1155 = vadd.f32 %v1068, %v1108
    %v1156 = vadd.f32 %v1069, %v1110
    %v1157 = vadd.f32 %v1070, %v1149
    %v1158 = vadd.f32 %v1071, %v1151
    %v1159 = vxor.u32 %v1155, 2147483648
    %v1160 = vmul.f32 %v1159, 1.442695
    %v1161 = vpow.pop %v1160
    %v1162 = vadd.f32 %v1161, 1.0
    %v1163 = vrcp.pop %v1162
    %v1164 = vmul.f32 1.0, %v1163
    %v1165 = vxor.u32 %v1156, 2147483648
    %v1166 = vmul.f32 %v1165, 1.442695
    %v1167 = vpow.pop %v1166
    %v1168 = vadd.f32 %v1167, 1.0
    %v1169 = vrcp.pop %v1168
    %v1170 = vmul.f32 1.0, %v1169
    %v1171 = vtanh.pop %v1157
    %v1172 = vxor.u32 %v1158, 2147483648
    %v1173 = vmul.f32 %v1172, 1.442695
    %v1174 = vpow.pop %v1173
    %v1175 = vadd.f32 %v1174, 1.0
    %v1176 = vrcp.pop %v1175
    %v1177 = vmul.f32 1.0, %v1176
    %v1178 = vmul.f32 %v1170, %v1064
    %v1179 = vmul.f32 %v1164, %v1171
    %v1180 = vadd.f32 %v1178, %v1179
    %v1181 = vtanh.pop %v1180
    %v1182 = vmul.f32 %v1177, %v1181
    %1183 = vst [vmem:[#allocation3 + $0x18] sm:$0xff] %v1182
    %v1184 = vld [vmem:[#allocation2 + $0x80] sm:$0xff]
    %v1185 = vld [vmem:[#allocation2 + $0x88] sm:$0xff]
    %v1186 = vld [vmem:[#allocation2 + $0x90] sm:$0xff]
    %v1187 = vld [vmem:[#allocation2 + $0x98] sm:$0xff]
    %v1188 = vpack.c.bf16 %v1182, %v1182
    %1189 = vmatprep.subr.bf16.mxu0 %v662
    %1190 = vmatpush1.bf16.msra.mxu0 %v661
    %1191 = vmatprep.subr.bf16.mxu0 %v666
    %1192 = vmatpush1.bf16.msra.mxu0 %v665
    %1193 = vmatprep.subr.bf16.mxu0 %v670
    %1194 = vmatpush1.bf16.msra.mxu0 %v669
    %1195 = vmatprep.subr.bf16.mxu0 %v674
    %1196 = vmatpush1.bf16.msra.mxu0 %v673
    %1197 = vmatprep.subr.bf16.mxu0 %v678
    %1198 = vmatpush1.bf16.msra.mxu0 %v677
    %1199 = vmatprep.subr.bf16.mxu0 %v682
    %1200 = vmatpush1.bf16.msra.mxu0 %v681
    %1201 = vmatprep.subr.bf16.mxu0 %v686
    %1202 = vmatpush1.bf16.msra.mxu0 %v685
    %1203 = vmatprep.subr.bf16.mxu0 %v690
    %1204 = vmatpush1.bf16.msra.mxu0 %v689
    %1205 = vmatprep.subr.bf16.mxu0 0
    %1206 = vmatpush1.bf16.msra.mxu0 0
    %1207 = vmatprep.subr.bf16.mxu0 0
    %1208 = vmatpush1.bf16.msra.mxu0 0
    %1209 = vmatprep.subr.bf16.mxu0 0
    %1210 = vmatpush1.bf16.msra.mxu0 0
    %1211 = vmatprep.subr.bf16.mxu0 0
    %1212 = vmatpush1.bf16.msra.mxu0 0
    %1213 = vmatprep.subr.bf16.mxu0 0
    %1214 = vmatpush1.bf16.msra.mxu0 0
    %1215 = vmatprep.subr.bf16.mxu0 0
    %1216 = vmatpush1.bf16.msra.mxu0 0
    %1217 = vmatprep.subr.bf16.mxu0 0
    %1218 = vmatpush1.bf16.msra.mxu0 0
    %1219 = vmatprep.subr.bf16.mxu0 0
    %1220 = vmatpush1.bf16.msra.mxu0 0
    %1221 = vmatprep.mubr.bf16.mxu0 0
    %1222 = vmatmul.mubr.bf16.gmra.mrb[0].mxu0 %v1188
    %v1223 = vpop.f32.mrb[0].mxu0
    %v1224 = vadd.f32 0.0, %v1223
    %v1225 = vpop.f32.mrb[0].mxu0
    %v1226 = vadd.f32 0.0, %v1225
    %v1227 = vpop.f32.mrb[0].mxu0
    %v1228 = vpop.f32.mrb[0].mxu0
    %1229 = vdwg.mxu0
    %1230 = vmatprep.subr.bf16.mxu0 %v664
    %1231 = vmatpush1.bf16.msra.mxu0 %v663
    %1232 = vmatprep.subr.bf16.mxu0 %v668
    %1233 = vmatpush1.bf16.msra.mxu0 %v667
    %1234 = vmatprep.subr.bf16.mxu0 %v672
    %1235 = vmatpush1.bf16.msra.mxu0 %v671
    %1236 = vmatprep.subr.bf16.mxu0 %v676
    %1237 = vmatpush1.bf16.msra.mxu0 %v675
    %1238 = vmatprep.subr.bf16.mxu0 %v680
    %1239 = vmatpush1.bf16.msra.mxu0 %v679
    %1240 = vmatprep.subr.bf16.mxu0 %v684
    %1241 = vmatpush1.bf16.msra.mxu0 %v683
    %1242 = vmatprep.subr.bf16.mxu0 %v688
    %1243 = vmatpush1.bf16.msra.mxu0 %v687
    %1244 = vmatprep.subr.bf16.mxu0 %v692
    %1245 = vmatpush1.bf16.msra.mxu0 %v691
    %1246 = vmatprep.subr.bf16.mxu0 0
    %1247 = vmatpush1.bf16.msra.mxu0 0
    %1248 = vmatprep.subr.bf16.mxu0 0
    %1249 = vmatpush1.bf16.msra.mxu0 0
    %1250 = vmatprep.subr.bf16.mxu0 0
    %1251 = vmatpush1.bf16.msra.mxu0 0
    %1252 = vmatprep.subr.bf16.mxu0 0
    %1253 = vmatpush1.bf16.msra.mxu0 0
    %1254 = vmatprep.subr.bf16.mxu0 0
    %1255 = vmatpush1.bf16.msra.mxu0 0
    %1256 = vmatprep.subr.bf16.mxu0 0
    %1257 = vmatpush1.bf16.msra.mxu0 0
    %1258 = vmatprep.subr.bf16.mxu0 0
    %1259 = vmatpush1.bf16.msra.mxu0 0
    %1260 = vmatprep.subr.bf16.mxu0 0
    %1261 = vmatpush1.bf16.msra.mxu0 0
    %1262 = vmatprep.mubr.bf16.mxu0 0
    %1263 = vmatmul.mubr.bf16.gmra.mrb[0].mxu0 %v1188
    %v1264 = vpop.f32.mrb[0].mxu0
    %v1265 = vadd.f32 0.0, %v1264
    %v1266 = vpop.f32.mrb[0].mxu0
    %v1267 = vadd.f32 0.0, %v1266
    %v1268 = vpop.f32.mrb[0].mxu0
    %v1269 = vpop.f32.mrb[0].mxu0
    %1270 = vdwg.mxu0
    %v1271 = vadd.f32 %v1184, %v1224
    %v1272 = vadd.f32 %v1185, %v1226
    %v1273 = vadd.f32 %v1186, %v1265
    %v1274 = vadd.f32 %v1187, %v1267
    %v1275 = vxor.u32 %v1271, 2147483648
    %v1276 = vmul.f32 %v1275, 1.442695
    %v1277 = vpow.pop %v1276
    %v1278 = vadd.f32 %v1277, 1.0
    %v1279 = vrcp.pop %v1278
    %v1280 = vmul.f32 1.0, %v1279
    %v1281 = vxor.u32 %v1272, 2147483648
    %v1282 = vmul.f32 %v1281, 1.442695
    %v1283 = vpow.pop %v1282
    %v1284 = vadd.f32 %v1283, 1.0
    %v1285 = vrcp.pop %v1284
    %v1286 = vmul.f32 1.0, %v1285
    %v1287 = vtanh.pop %v1273
    %v1288 = vxor.u32 %v1274, 2147483648
    %v1289 = vmul.f32 %v1288, 1.442695
    %v1290 = vpow.pop %v1289
    %v1291 = vadd.f32 %v1290, 1.0
    %v1292 = vrcp.pop %v1291
    %v1293 = vmul.f32 1.0, %v1292
    %v1294 = vmul.f32 %v1286, %v1180
    %v1295 = vmul.f32 %v1280, %v1287
    %v1296 = vadd.f32 %v1294, %v1295
    %v1297 = vtanh.pop %v1296
    %v1298 = vmul.f32 %v1293, %v1297
    %1299 = vst [vmem:[#allocation3 + $0x20] sm:$0xff] %v1298
    %v1300 = vld [vmem:[#allocation2 + $0xa0] sm:$0xff]
    %v1301 = vld [vmem:[#allocation2 + $0xa8] sm:$0xff]
    %v1302 = vld [vmem:[#allocation2 + $0xb0] sm:$0xff]
    %v1303 = vld [vmem:[#allocation2 + $0xb8] sm:$0xff]
    %v1304 = vpack.c.bf16 %v1298, %v1298
    %1305 = vmatprep.subr.bf16.mxu0 %v662
    %1306 = vmatpush1.bf16.msra.mxu0 %v661
    %1307 = vmatprep.subr.bf16.mxu0 %v666
    %1308 = vmatpush1.bf16.msra.mxu0 %v665
    %1309 = vmatprep.subr.bf16.mxu0 %v670
    %1310 = vmatpush1.bf16.msra.mxu0 %v669
    %1311 = vmatprep.subr.bf16.mxu0 %v674
    %1312 = vmatpush1.bf16.msra.mxu0 %v673
    %1313 = vmatprep.subr.bf16.mxu0 %v678
    %1314 = vmatpush1.bf16.msra.mxu0 %v677
    %1315 = vmatprep.subr.bf16.mxu0 %v682
    %1316 = vmatpush1.bf16.msra.mxu0 %v681
    %1317 = vmatprep.subr.bf16.mxu0 %v686
    %1318 = vmatpush1.bf16.msra.mxu0 %v685
    %1319 = vmatprep.subr.bf16.mxu0 %v690
    %1320 = vmatpush1.bf16.msra.mxu0 %v689
    %1321 = vmatprep.subr.bf16.mxu0 0
    %1322 = vmatpush1.bf16.msra.mxu0 0
    %1323 = vmatprep.subr.bf16.mxu0 0
    %1324 = vmatpush1.bf16.msra.mxu0 0
    %1325 = vmatprep.subr.bf16.mxu0 0
    %1326 = vmatpush1.bf16.msra.mxu0 0
    %1327 = vmatprep.subr.bf16.mxu0 0
    %1328 = vmatpush1.bf16.msra.mxu0 0
    %1329 = vmatprep.subr.bf16.mxu0 0
    %1330 = vmatpush1.bf16.msra.mxu0 0
    %1331 = vmatprep.subr.bf16.mxu0 0
    %1332 = vmatpush1.bf16.msra.mxu0 0
    %1333 = vmatprep.subr.bf16.mxu0 0
    %1334 = vmatpush1.bf16.msra.mxu0 0
    %1335 = vmatprep.subr.bf16.mxu0 0
    %1336 = vmatpush1.bf16.msra.mxu0 0
    %1337 = vmatprep.mubr.bf16.mxu0 0
    %1338 = vmatmul.mubr.bf16.gmra.mrb[0].mxu0 %v1304
    %v1339 = vpop.f32.mrb[0].mxu0
    %v1340 = vadd.f32 0.0, %v1339
    %v1341 = vpop.f32.mrb[0].mxu0
    %v1342 = vadd.f32 0.0, %v1341
    %v1343 = vpop.f32.mrb[0].mxu0
    %v1344 = vpop.f32.mrb[0].mxu0
    %1345 = vdwg.mxu0
    %1346 = vmatprep.subr.bf16.mxu0 %v664
    %1347 = vmatpush1.bf16.msra.mxu0 %v663
    %1348 = vmatprep.subr.bf16.mxu0 %v668
    %1349 = vmatpush1.bf16.msra.mxu0 %v667
    %1350 = vmatprep.subr.bf16.mxu0 %v672
    %1351 = vmatpush1.bf16.msra.mxu0 %v671
    %1352 = vmatprep.subr.bf16.mxu0 %v676
    %1353 = vmatpush1.bf16.msra.mxu0 %v675
    %1354 = vmatprep.subr.bf16.mxu0 %v680
    %1355 = vmatpush1.bf16.msra.mxu0 %v679
    %1356 = vmatprep.subr.bf16.mxu0 %v684
    %1357 = vmatpush1.bf16.msra.mxu0 %v683
    %1358 = vmatprep.subr.bf16.mxu0 %v688
    %1359 = vmatpush1.bf16.msra.mxu0 %v687
    %1360 = vmatprep.subr.bf16.mxu0 %v692
    %1361 = vmatpush1.bf16.msra.mxu0 %v691
    %1362 = vmatprep.subr.bf16.mxu0 0
    %1363 = vmatpush1.bf16.msra.mxu0 0
    %1364 = vmatprep.subr.bf16.mxu0 0
    %1365 = vmatpush1.bf16.msra.mxu0 0
    %1366 = vmatprep.subr.bf16.mxu0 0
    %1367 = vmatpush1.bf16.msra.mxu0 0
    %1368 = vmatprep.subr.bf16.mxu0 0
    %1369 = vmatpush1.bf16.msra.mxu0 0
    %1370 = vmatprep.subr.bf16.mxu0 0
    %1371 = vmatpush1.bf16.msra.mxu0 0
    %1372 = vmatprep.subr.bf16.mxu0 0
    %1373 = vmatpush1.bf16.msra.mxu0 0
    %1374 = vmatprep.subr.bf16.mxu0 0
    %1375 = vmatpush1.bf16.msra.mxu0 0
    %1376 = vmatprep.subr.bf16.mxu0 0
    %1377 = vmatpush1.bf16.msra.mxu0 0
    %1378 = vmatprep.mubr.bf16.mxu0 0
    %1379 = vmatmul.mubr.bf16.gmra.mrb[0].mxu0 %v1304
    %v1380 = vpop.f32.mrb[0].mxu0
    %v1381 = vadd.f32 0.0, %v1380
    %v1382 = vpop.f32.mrb[0].mxu0
    %v1383 = vadd.f32 0.0, %v1382
    %v1384 = vpop.f32.mrb[0].mxu0
    %v1385 = vpop.f32.mrb[0].mxu0
    %1386 = vdwg.mxu0
    %v1387 = vadd.f32 %v1300, %v1340
    %v1388 = vadd.f32 %v1301, %v1342
    %v1389 = vadd.f32 %v1302, %v1381
    %v1390 = vadd.f32 %v1303, %v1383
    %v1391 = vxor.u32 %v1387, 2147483648
    %v1392 = vmul.f32 %v1391, 1.442695
    %v1393 = vpow.pop %v1392
    %v1394 = vadd.f32 %v1393, 1.0
    %v1395 = vrcp.pop %v1394
    %v1396 = vmul.f32 1.0, %v1395
    %v1397 = vxor.u32 %v1388, 2147483648
    %v1398 = vmul.f32 %v1397, 1.442695
    %v1399 = vpow.pop %v1398
    %v1400 = vadd.f32 %v1399, 1.0
    %v1401 = vrcp.pop %v1400
    %v1402 = vmul.f32 1.0, %v1401
    %v1403 = vtanh.pop %v1389
    %v1404 = vxor.u32 %v1390, 2147483648
    %v1405 = vmul.f32 %v1404, 1.442695
    %v1406 = vpow.pop %v1405
    %v1407 = vadd.f32 %v1406, 1.0
    %v1408 = vrcp.pop %v1407
    %v1409 = vmul.f32 1.0, %v1408
    %v1410 = vmul.f32 %v1402, %v1296
    %v1411 = vmul.f32 %v1396, %v1403
    %v1412 = vadd.f32 %v1410, %v1411
    %v1413 = vtanh.pop %v1412
    %v1414 = vmul.f32 %v1409, %v1413
    %1415 = vst [vmem:[#allocation3 + $0x28] sm:$0xff] %v1414
    %v1416 = vld [vmem:[#allocation2 + $0xc0] sm:$0xff]
    %v1417 = vld [vmem:[#allocation2 + $0xc8] sm:$0xff]
    %v1418 = vld [vmem:[#allocation2 + $0xd0] sm:$0xff]
    %v1419 = vld [vmem:[#allocation2 + $0xd8] sm:$0xff]
    %v1420 = vpack.c.bf16 %v1414, %v1414
    %1421 = vmatprep.subr.bf16.mxu0 %v662
    %1422 = vmatpush1.bf16.msra.mxu0 %v661
    %1423 = vmatprep.subr.bf16.mxu0 %v666
    %1424 = vmatpush1.bf16.msra.mxu0 %v665
    %1425 = vmatprep.subr.bf16.mxu0 %v670
    %1426 = vmatpush1.bf16.msra.mxu0 %v669
    %1427 = vmatprep.subr.bf16.mxu0 %v674
    %1428 = vmatpush1.bf16.msra.mxu0 %v673
    %1429 = vmatprep.subr.bf16.mxu0 %v678
    %1430 = vmatpush1.bf16.msra.mxu0 %v677
    %1431 = vmatprep.subr.bf16.mxu0 %v682
    %1432 = vmatpush1.bf16.msra.mxu0 %v681
    %1433 = vmatprep.subr.bf16.mxu0 %v686
    %1434 = vmatpush1.bf16.msra.mxu0 %v685
    %1435 = vmatprep.subr.bf16.mxu0 %v690
    %1436 = vmatpush1.bf16.msra.mxu0 %v689
    %1437 = vmatprep.subr.bf16.mxu0 0
    %1438 = vmatpush1.bf16.msra.mxu0 0
    %1439 = vmatprep.subr.bf16.mxu0 0
    %1440 = vmatpush1.bf16.msra.mxu0 0
    %1441 = vmatprep.subr.bf16.mxu0 0
    %1442 = vmatpush1.bf16.msra.mxu0 0
    %1443 = vmatprep.subr.bf16.mxu0 0
    %1444 = vmatpush1.bf16.msra.mxu0 0
    %1445 = vmatprep.subr.bf16.mxu0 0
    %1446 = vmatpush1.bf16.msra.mxu0 0
    %1447 = vmatprep.subr.bf16.mxu0 0
    %1448 = vmatpush1.bf16.msra.mxu0 0
    %1449 = vmatprep.subr.bf16.mxu0 0
    %1450 = vmatpush1.bf16.msra.mxu0 0
    %1451 = vmatprep.subr.bf16.mxu0 0
    %1452 = vmatpush1.bf16.msra.mxu0 0
    %1453 = vmatprep.mubr.bf16.mxu0 0
    %1454 = vmatmul.mubr.bf16.gmra.mrb[0].mxu0 %v1420
    %v1455 = vpop.f32.mrb[0].mxu0
    %v1456 = vadd.f32 0.0, %v1455
    %v1457 = vpop.f32.mrb[0].mxu0
    %v1458 = vadd.f32 0.0, %v1457
    %v1459 = vpop.f32.mrb[0].mxu0
    %v1460 = vpop.f32.mrb[0].mxu0
    %1461 = vdwg.mxu0
    %1462 = vmatprep.subr.bf16.mxu0 %v664
    %1463 = vmatpush1.bf16.msra.mxu0 %v663
    %1464 = vmatprep.subr.bf16.mxu0 %v668
    %1465 = vmatpush1.bf16.msra.mxu0 %v667
    %1466 = vmatprep.subr.bf16.mxu0 %v672
    %1467 = vmatpush1.bf16.msra.mxu0 %v671
    %1468 = vmatprep.subr.bf16.mxu0 %v676
    %1469 = vmatpush1.bf16.msra.mxu0 %v675
    %1470 = vmatprep.subr.bf16.mxu0 %v680
    %1471 = vmatpush1.bf16.msra.mxu0 %v679
    %1472 = vmatprep.subr.bf16.mxu0 %v684
    %1473 = vmatpush1.bf16.msra.mxu0 %v683
    %1474 = vmatprep.subr.bf16.mxu0 %v688
    %1475 = vmatpush1.bf16.msra.mxu0 %v687
    %1476 = vmatprep.subr.bf16.mxu0 %v692
    %1477 = vmatpush1.bf16.msra.mxu0 %v691
    %1478 = vmatprep.subr.bf16.mxu0 0
    %1479 = vmatpush1.bf16.msra.mxu0 0
    %1480 = vmatprep.subr.bf16.mxu0 0
    %1481 = vmatpush1.bf16.msra.mxu0 0
    %1482 = vmatprep.subr.bf16.mxu0 0
    %1483 = vmatpush1.bf16.msra.mxu0 0
    %1484 = vmatprep.subr.bf16.mxu0 0
    %1485 = vmatpush1.bf16.msra.mxu0 0
    %1486 = vmatprep.subr.bf16.mxu0 0
    %1487 = vmatpush1.bf16.msra.mxu0 0
    %1488 = vmatprep.subr.bf16.mxu0 0
    %1489 = vmatpush1.bf16.msra.mxu0 0
    %1490 = vmatprep.subr.bf16.mxu0 0
    %1491 = vmatpush1.bf16.msra.mxu0 0
    %1492 = vmatprep.subr.bf16.mxu0 0
    %1493 = vmatpush1.bf16.msra.mxu0 0
    %1494 = vmatprep.mubr.bf16.mxu0 0
    %1495 = vmatmul.mubr.bf16.gmra.mrb[0].mxu0 %v1420
    %v1496 = vpop.f32.mrb[0].mxu0
    %v1497 = vadd.f32 0.0, %v1496
    %v1498 = vpop.f32.mrb[0].mxu0
    %v1499 = vadd.f32 0.0, %v1498
    %v1500 = vpop.f32.mrb[0].mxu0
    %v1501 = vpop.f32.mrb[0].mxu0
    %1502 = vdwg.mxu0
    %v1503 = vadd.f32 %v1416, %v1456
    %v1504 = vadd.f32 %v1417, %v1458
    %v1505 = vadd.f32 %v1418, %v1497
    %v1506 = vadd.f32 %v1419, %v1499
    %v1507 = vxor.u32 %v1503, 2147483648
    %v1508 = vmul.f32 %v1507, 1.442695
    %v1509 = vpow.pop %v1508
    %v1510 = vadd.f32 %v1509, 1.0
    %v1511 = vrcp.pop %v1510
    %v1512 = vmul.f32 1.0, %v1511
    %v1513 = vxor.u32 %v1504, 2147483648
    %v1514 = vmul.f32 %v1513, 1.442695
    %v1515 = vpow.pop %v1514
    %v1516 = vadd.f32 %v1515, 1.0
    %v1517 = vrcp.pop %v1516
    %v1518 = vmul.f32 1.0, %v1517
    %v1519 = vtanh.pop %v1505
    %v1520 = vxor.u32 %v1506, 2147483648
    %v1521 = vmul.f32 %v1520, 1.442695
    %v1522 = vpow.pop %v1521
    %v1523 = vadd.f32 %v1522, 1.0
    %v1524 = vrcp.pop %v1523
    %v1525 = vmul.f32 1.0, %v1524
    %v1526 = vmul.f32 %v1518, %v1412
    %v1527 = vmul.f32 %v1512, %v1519
    %v1528 = vadd.f32 %v1526, %v1527
    %v1529 = vtanh.pop %v1528
    %v1530 = vmul.f32 %v1525, %v1529
    %1531 = vst [vmem:[#allocation3 + $0x30] sm:$0xff] %v1530
    %v1532 = vld [vmem:[#allocation2 + $0xe0] sm:$0xff]
    %v1533 = vld [vmem:[#allocation2 + $0xe8] sm:$0xff]
    %v1534 = vld [vmem:[#allocation2 + $0xf0] sm:$0xff]
    %v1535 = vld [vmem:[#allocation2 + $0xf8] sm:$0xff]
    %v1536 = vpack.c.bf16 %v1530, %v1530
    %1537 = vmatprep.subr.bf16.mxu0 %v662
    %1538 = vmatpush1.bf16.msra.mxu0 %v661
    %1539 = vmatprep.subr.bf16.mxu0 %v666
    %1540 = vmatpush1.bf16.msra.mxu0 %v665
    %1541 = vmatprep.subr.bf16.mxu0 %v670
    %1542 = vmatpush1.bf16.msra.mxu0 %v669
    %1543 = vmatprep.subr.bf16.mxu0 %v674
    %1544 = vmatpush1.bf16.msra.mxu0 %v673
    %1545 = vmatprep.subr.bf16.mxu0 %v678
    %1546 = vmatpush1.bf16.msra.mxu0 %v677
    %1547 = vmatprep.subr.bf16.mxu0 %v682
    %1548 = vmatpush1.bf16.msra.mxu0 %v681
    %1549 = vmatprep.subr.bf16.mxu0 %v686
    %1550 = vmatpush1.bf16.msra.mxu0 %v685
    %1551 = vmatprep.subr.bf16.mxu0 %v690
    %1552 = vmatpush1.bf16.msra.mxu0 %v689
    %1553 = vmatprep.subr.bf16.mxu0 0
    %1554 = vmatpush1.bf16.msra.mxu0 0
    %1555 = vmatprep.subr.bf16.mxu0 0
    %1556 = vmatpush1.bf16.msra.mxu0 0
    %1557 = vmatprep.subr.bf16.mxu0 0
    %1558 = vmatpush1.bf16.msra.mxu0 0
    %1559 = vmatprep.subr.bf16.mxu0 0
    %1560 = vmatpush1.bf16.msra.mxu0 0
    %1561 = vmatprep.subr.bf16.mxu0 0
    %1562 = vmatpush1.bf16.msra.mxu0 0
    %1563 = vmatprep.subr.bf16.mxu0 0
    %1564 = vmatpush1.bf16.msra.mxu0 0
    %1565 = vmatprep.subr.bf16.mxu0 0
    %1566 = vmatpush1.bf16.msra.mxu0 0
    %1567 = vmatprep.subr.bf16.mxu0 0
    %1568 = vmatpush1.bf16.msra.mxu0 0
    %1569 = vmatprep.mubr.bf16.mxu0 0
    %1570 = vmatmul.mubr.bf16.gmra.mrb[0].mxu0 %v1536
    %v1571 = vpop.f32.mrb[0].mxu0
    %v1572 = vadd.f32 0.0, %v1571
    %v1573 = vpop.f32.mrb[0].mxu0
    %v1574 = vadd.f32 0.0, %v1573
    %v1575 = vpop.f32.mrb[0].mxu0
    %v1576 = vpop.f32.mrb[0].mxu0
    %1577 = vdwg.mxu0
    %1578 = vmatprep.subr.bf16.mxu0 %v664
    %1579 = vmatpush1.bf16.msra.mxu0 %v663
    %1580 = vmatprep.subr.bf16.mxu0 %v668
    %1581 = vmatpush1.bf16.msra.mxu0 %v667
    %1582 = vmatprep.subr.bf16.mxu0 %v672
    %1583 = vmatpush1.bf16.msra.mxu0 %v671
    %1584 = vmatprep.subr.bf16.mxu0 %v676
    %1585 = vmatpush1.bf16.msra.mxu0 %v675
    %1586 = vmatprep.subr.bf16.mxu0 %v680
    %1587 = vmatpush1.bf16.msra.mxu0 %v679
    %1588 = vmatprep.subr.bf16.mxu0 %v684
    %1589 = vmatpush1.bf16.msra.mxu0 %v683
    %1590 = vmatprep.subr.bf16.mxu0 %v688
    %1591 = vmatpush1.bf16.msra.mxu0 %v687
    %1592 = vmatprep.subr.bf16.mxu0 %v692
    %1593 = vmatpush1.bf16.msra.mxu0 %v691
    %1594 = vmatprep.subr.bf16.mxu0 0
    %1595 = vmatpush1.bf16.msra.mxu0 0
    %1596 = vmatprep.subr.bf16.mxu0 0
    %1597 = vmatpush1.bf16.msra.mxu0 0
    %1598 = vmatprep.subr.bf16.mxu0 0
    %1599 = vmatpush1.bf16.msra.mxu0 0
    %1600 = vmatprep.subr.bf16.mxu0 0
    %1601 = vmatpush1.bf16.msra.mxu0 0
    %1602 = vmatprep.subr.bf16.mxu0 0
    %1603 = vmatpush1.bf16.msra.mxu0 0
    %1604 = vmatprep.subr.bf16.mxu0 0
    %1605 = vmatpush1.bf16.msra.mxu0 0
    %1606 = vmatprep.subr.bf16.mxu0 0
    %1607 = vmatpush1.bf16.msra.mxu0 0
    %1608 = vmatprep.subr.bf16.mxu0 0
    %1609 = vmatpush1.bf16.msra.mxu0 0
    %1610 = vmatprep.mubr.bf16.mxu0 0
    %1611 = vmatmul.mubr.bf16.gmra.mrb[0].mxu0 %v1536
    %v1612 = vpop.f32.mrb[0].mxu0
    %v1613 = vadd.f32 0.0, %v1612
    %v1614 = vpop.f32.mrb[0].mxu0
    %v1615 = vadd.f32 0.0, %v1614
    %v1616 = vpop.f32.mrb[0].mxu0
    %v1617 = vpop.f32.mrb[0].mxu0
    %1618 = vdwg.mxu0
    %v1619 = vadd.f32 %v1532, %v1572
    %v1620 = vadd.f32 %v1533, %v1574
    %v1621 = vadd.f32 %v1534, %v1613
    %v1622 = vadd.f32 %v1535, %v1615
    %v1623 = vxor.u32 %v1619, 2147483648
    %v1624 = vmul.f32 %v1623, 1.442695
    %v1625 = vpow.pop %v1624
    %v1626 = vadd.f32 %v1625, 1.0
    %v1627 = vrcp.pop %v1626
    %v1628 = vmul.f32 1.0, %v1627
    %v1629 = vxor.u32 %v1620, 2147483648
    %v1630 = vmul.f32 %v1629, 1.442695
    %v1631 = vpow.pop %v1630
    %v1632 = vadd.f32 %v1631, 1.0
    %v1633 = vrcp.pop %v1632
    %v1634 = vmul.f32 1.0, %v1633
    %v1635 = vtanh.pop %v1621
    %v1636 = vxor.u32 %v1622, 2147483648
    %v1637 = vmul.f32 %v1636, 1.442695
    %v1638 = vpow.pop %v1637
    %v1639 = vadd.f32 %v1638, 1.0
    %v1640 = vrcp.pop %v1639
    %v1641 = vmul.f32 1.0, %v1640
    %v1642 = vmul.f32 %v1634, %v1528
    %v1643 = vmul.f32 %v1628, %v1635
    %v1644 = vadd.f32 %v1642, %v1643
    %v1645 = vtanh.pop %v1644
    %v1646 = vmul.f32 %v1641, %v1645
    %1647 = vst [vmem:[#allocation3 + $0x38] sm:$0xff] %v1646
    %v1648 = vld [vmem:[#allocation2 + $0x100] sm:$0xff]
    %v1649 = vld [vmem:[#allocation2 + $0x108] sm:$0xff]
    %v1650 = vld [vmem:[#allocation2 + $0x110] sm:$0xff]
    %v1651 = vld [vmem:[#allocation2 + $0x118] sm:$0xff]
    %v1652 = vpack.c.bf16 %v1646, %v1646
    %1653 = vmatprep.subr.bf16.mxu0 %v662
    %1654 = vmatpush1.bf16.msra.mxu0 %v661
    %1655 = vmatprep.subr.bf16.mxu0 %v666
    %1656 = vmatpush1.bf16.msra.mxu0 %v665
    %1657 = vmatprep.subr.bf16.mxu0 %v670
    %1658 = vmatpush1.bf16.msra.mxu0 %v669
    %1659 = vmatprep.subr.bf16.mxu0 %v674
    %1660 = vmatpush1.bf16.msra.mxu0 %v673
    %1661 = vmatprep.subr.bf16.mxu0 %v678
    %1662 = vmatpush1.bf16.msra.mxu0 %v677
    %1663 = vmatprep.subr.bf16.mxu0 %v682
    %1664 = vmatpush1.bf16.msra.mxu0 %v681
    %1665 = vmatprep.subr.bf16.mxu0 %v686
    %1666 = vmatpush1.bf16.msra.mxu0 %v685
    %1667 = vmatprep.subr.bf16.mxu0 %v690
    %1668 = vmatpush1.bf16.msra.mxu0 %v689
    %1669 = vmatprep.subr.bf16.mxu0 0
    %1670 = vmatpush1.bf16.msra.mxu0 0
    %1671 = vmatprep.subr.bf16.mxu0 0
    %1672 = vmatpush1.bf16.msra.mxu0 0
    %1673 = vmatprep.subr.bf16.mxu0 0
    %1674 = vmatpush1.bf16.msra.mxu0 0
    %1675 = vmatprep.subr.bf16.mxu0 0
    %1676 = vmatpush1.bf16.msra.mxu0 0
    %1677 = vmatprep.subr.bf16.mxu0 0
    %1678 = vmatpush1.bf16.msra.mxu0 0
    %1679 = vmatprep.subr.bf16.mxu0 0
    %1680 = vmatpush1.bf16.msra.mxu0 0
    %1681 = vmatprep.subr.bf16.mxu0 0
    %1682 = vmatpush1.bf16.msra.mxu0 0
    %1683 = vmatprep.subr.bf16.mxu0 0
    %1684 = vmatpush1.bf16.msra.mxu0 0
    %1685 = vmatprep.mubr.bf16.mxu0 0
    %1686 = vmatmul.mubr.bf16.gmra.mrb[0].mxu0 %v1652
    %v1687 = vpop.f32.mrb[0].mxu0
    %v1688 = vadd.f32 0.0, %v1687
    %v1689 = vpop.f32.mrb[0].mxu0
    %v1690 = vadd.f32 0.0, %v1689
    %v1691 = vpop.f32.mrb[0].mxu0
    %v1692 = vpop.f32.mrb[0].mxu0
    %1693 = vdwg.mxu0
    %1694 = vmatprep.subr.bf16.mxu0 %v664
    %1695 = vmatpush1.bf16.msra.mxu0 %v663
    %1696 = vmatprep.subr.bf16.mxu0 %v668
    %1697 = vmatpush1.bf16.msra.mxu0 %v667
    %1698 = vmatprep.subr.bf16.mxu0 %v672
    %1699 = vmatpush1.bf16.msra.mxu0 %v671
    %1700 = vmatprep.subr.bf16.mxu0 %v676
    %1701 = vmatpush1.bf16.msra.mxu0 %v675
    %1702 = vmatprep.subr.bf16.mxu0 %v680
    %1703 = vmatpush1.bf16.msra.mxu0 %v679
    %1704 = vmatprep.subr.bf16.mxu0 %v684
    %1705 = vmatpush1.bf16.msra.mxu0 %v683
    %1706 = vmatprep.subr.bf16.mxu0 %v688
    %1707 = vmatpush1.bf16.msra.mxu0 %v687
    %1708 = vmatprep.subr.bf16.mxu0 %v692
    %1709 = vmatpush1.bf16.msra.mxu0 %v691
    %1710 = vmatprep.subr.bf16.mxu0 0
    %1711 = vmatpush1.bf16.msra.mxu0 0
    %1712 = vmatprep.subr.bf16.mxu0 0
    %1713 = vmatpush1.bf16.msra.mxu0 0
    %1714 = vmatprep.subr.bf16.mxu0 0
    %1715 = vmatpush1.bf16.msra.mxu0 0
    %1716 = vmatprep.subr.bf16.mxu0 0
    %1717 = vmatpush1.bf16.msra.mxu0 0
    %1718 = vmatprep.subr.bf16.mxu0 0
    %1719 = vmatpush1.bf16.msra.mxu0 0
    %1720 = vmatprep.subr.bf16.mxu0 0
    %1721 = vmatpush1.bf16.msra.mxu0 0
    %1722 = vmatprep.subr.bf16.mxu0 0
    %1723 = vmatpush1.bf16.msra.mxu0 0
    %1724 = vmatprep.subr.bf16.mxu0 0
    %1725 = vmatpush1.bf16.msra.mxu0 0
    %1726 = vmatprep.mubr.bf16.mxu0 0
    %1727 = vmatmul.mubr.bf16.gmra.mrb[0].mxu0 %v1652
    %v1728 = vpop.f32.mrb[0].mxu0
    %v1729 = vadd.f32 0.0, %v1728
    %v1730 = vpop.f32.mrb[0].mxu0
    %v1731 = vadd.f32 0.0, %v1730
    %v1732 = vpop.f32.mrb[0].mxu0
    %v1733 = vpop.f32.mrb[0].mxu0
    %1734 = vdwg.mxu0
    %v1735 = vadd.f32 %v1648, %v1688
    %v1736 = vadd.f32 %v1649, %v1690
    %v1737 = vadd.f32 %v1650, %v1729
    %v1738 = vadd.f32 %v1651, %v1731
    %v1739 = vxor.u32 %v1735, 2147483648
    %v1740 = vmul.f32 %v1739, 1.442695
    %v1741 = vpow.pop %v1740
    %v1742 = vadd.f32 %v1741, 1.0
    %v1743 = vrcp.pop %v1742
    %v1744 = vmul.f32 1.0, %v1743
    %v1745 = vxor.u32 %v1736, 2147483648
    %v1746 = vmul.f32 %v1745, 1.442695
    %v1747 = vpow.pop %v1746
    %v1748 = vadd.f32 %v1747, 1.0
    %v1749 = vrcp.pop %v1748
    %v1750 = vmul.f32 1.0, %v1749
    %v1751 = vtanh.pop %v1737
    %v1752 = vxor.u32 %v1738, 2147483648
    %v1753 = vmul.f32 %v1752, 1.442695
    %v1754 = vpow.pop %v1753
    %v1755 = vadd.f32 %v1754, 1.0
    %v1756 = vrcp.pop %v1755
    %v1757 = vmul.f32 1.0, %v1756
    %v1758 = vmul.f32 %v1750, %v1644
    %v1759 = vmul.f32 %v1744, %v1751
    %v1760 = vadd.f32 %v1758, %v1759
    %v1761 = vtanh.pop %v1760
    %v1762 = vmul.f32 %v1757, %v1761
    %1763 = vst [vmem:[#allocation3 + $0x40] sm:$0xff] %v1762
    %v1764 = vld [vmem:[#allocation3] sm:$0xff]
    %v1765 = vld [vmem:[#allocation3 + $0x8] sm:$0xff]
    %v1766 = vld [vmem:[#allocation3 + $0x10] sm:$0xff]
    %v1767 = vld [vmem:[#allocation3 + $0x18] sm:$0xff]
    %v1768 = vld [vmem:[#allocation3 + $0x20] sm:$0xff]
    %v1769 = vld [vmem:[#allocation3 + $0x28] sm:$0xff]
    %v1770 = vld [vmem:[#allocation3 + $0x30] sm:$0xff]
    %v1771 = vld [vmem:[#allocation3 + $0x38] sm:$0xff]
    %v1772 = vld [vmem:[#allocation3 + $0x40] sm:$0xff]
    %v1773 = vpack.c.bf16 %v1765, %v1764
    %v1774 = vpack.c.bf16 %v1767, %v1766
    %v1775 = vpack.c.bf16 %v1769, %v1768
    %v1776 = vpack.c.bf16 %v1771, %v1770
    %v1777 = vpack.c.bf16 %v1772, %v1772
    %v1778 = vld [vmem:[#allocation10] sm:$0xf]
    %v1779 = vld [vmem:[#allocation10 + $0x4] sm:$0xf]
    %v1780 = vld [vmem:[#allocation10 + $0x8] sm:$0xf]
    %v1781 = vld [vmem:[#allocation10 + $0xc] sm:$0xf]
    %v1782 = vld [vmem:[#allocation10 + $0x10] sm:$0xf]
    %v1783 = vld [vmem:[#allocation10 + $0x14] sm:$0xf]
    %v1784 = vld [vmem:[#allocation10 + $0x18] sm:$0xf]
    %v1785 = vld [vmem:[#allocation10 + $0x1c] sm:$0xf]
    %v1786 = vld [vmem:[#allocation10 + $0x20] sm:$0xf]
    %v1787 = vld [vmem:[#allocation10 + $0x24] sm:$0xf]
    %v1788 = vld [vmem:[#allocation10 + $0x28] sm:$0xf]
    %v1789 = vld [vmem:[#allocation10 + $0x2c] sm:$0xf]
    %v1790 = vld [vmem:[#allocation10 + $0x30] sm:$0xf]
    %v1791 = vld [vmem:[#allocation10 + $0x34] sm:$0xf]
    %v1792 = vld [vmem:[#allocation10 + $0x38] sm:$0xf]
    %v1793 = vld [vmem:[#allocation10 + $0x3c] sm:$0xf]
    %v1794 = vld [vmem:[%s5] sm:$0x1]
    %v1796 = vlaneseq
    %v1797 = vshrl.u32 %v1796, 7
    %v1798 = vsub.s32 0, %v1797
    %v1799 = vrot.slane %v1794, %v1798
    %v1817 = vunpack.c.l.b16 %v1778
    %v1818 = vunpack.c.l.b16 %v1779
    %v1819 = vunpack.c.l.b16 %v1780
    %v1820 = vunpack.c.l.b16 %v1781
    %v1821 = vunpack.c.l.b16 %v1782
    %v1822 = vunpack.c.l.b16 %v1783
    %v1823 = vunpack.c.l.b16 %v1784
    %v1824 = vunpack.c.l.b16 %v1785
    %v1825 = vunpack.c.l.b16 %v1786
    %v1826 = vunpack.c.l.b16 %v1787
    %v1827 = vunpack.c.l.b16 %v1788
    %v1828 = vunpack.c.l.b16 %v1789
    %v1829 = vunpack.c.l.b16 %v1790
    %v1830 = vunpack.c.l.b16 %v1791
    %v1831 = vunpack.c.l.b16 %v1792
    %v1832 = vunpack.c.l.b16 %v1793
    %v1833 = vpack.c.b16 %v1818, %v1817
    %v1834 = vpack.c.b16 %v1820, %v1819
    %v1835 = vpack.c.b16 %v1822, %v1821
    %v1836 = vpack.c.b16 %v1824, %v1823
    %v1837 = vpack.c.b16 %v1826, %v1825
    %v1838 = vpack.c.b16 %v1828, %v1827
    %v1839 = vpack.c.b16 %v1830, %v1829
    %v1840 = vpack.c.b16 %v1832, %v1831
    %1849 = vmatprep.subr.bf16.mxu0 0
    %1850 = vmatpush1.bf16.msra.mxu0 %v1833
    %1851 = vmatprep.subr.bf16.mxu0 0
    %1852 = vmatpush1.bf16.msra.mxu0 %v1834
    %1853 = vmatprep.subr.bf16.mxu0 0
    %1854 = vmatpush1.bf16.msra.mxu0 %v1835
    %1855 = vmatprep.subr.bf16.mxu0 0
    %1856 = vmatpush1.bf16.msra.mxu0 %v1836
    %1857 = vmatprep.subr.bf16.mxu0 0
    %1858 = vmatpush1.bf16.msra.mxu0 %v1837
    %1859 = vmatprep.subr.bf16.mxu0 0
    %1860 = vmatpush1.bf16.msra.mxu0 %v1838
    %1861 = vmatprep.subr.bf16.mxu0 0
    %1862 = vmatpush1.bf16.msra.mxu0 %v1839
    %1863 = vmatprep.subr.bf16.mxu0 0
    %1864 = vmatpush1.bf16.msra.mxu0 %v1840
    %1865 = vmatprep.subr.bf16.mxu0 0
    %1866 = vmatpush1.bf16.msra.mxu0 0
    %1867 = vmatprep.subr.bf16.mxu0 0
    %1868 = vmatpush1.bf16.msra.mxu0 0
    %1869 = vmatprep.subr.bf16.mxu0 0
    %1870 = vmatpush1.bf16.msra.mxu0 0
    %1871 = vmatprep.subr.bf16.mxu0 0
    %1872 = vmatpush1.bf16.msra.mxu0 0
    %1873 = vmatprep.subr.bf16.mxu0 0
    %1874 = vmatpush1.bf16.msra.mxu0 0
    %1875 = vmatprep.subr.bf16.mxu0 0
    %1876 = vmatpush1.bf16.msra.mxu0 0
    %1877 = vmatprep.subr.bf16.mxu0 0
    %1878 = vmatpush1.bf16.msra.mxu0 0
    %1879 = vmatprep.subr.bf16.mxu0 0
    %1880 = vmatpush1.bf16.msra.mxu0 0
    %1881 = vmatprep.mubr.bf16.mxu0 0
    %1882 = vmatmul.mubr.bf16.gmra.mrb[0].mxu0 %v1773
    %v1883 = vpop.f32.mrb[0].mxu0
    %v1884 = vadd.f32 %v1799, %v1883
    %v1885 = vpop.f32.mrb[0].mxu0
    %v1886 = vpop.f32.mrb[0].mxu0
    %v1887 = vadd.f32 %v1799, %v1886
    %v1888 = vpop.f32.mrb[0].mxu0
    %1889 = vmatprep.mubr.bf16.mxu0 0
    %1890 = vmatmul.mubr.bf16.gmra.mrb[0].mxu0 %v1774
    %v1891 = vpop.f32.mrb[0].mxu0
    %v1892 = vadd.f32 %v1799, %v1891
    %v1893 = vpop.f32.mrb[0].mxu0
    %v1894 = vpop.f32.mrb[0].mxu0
    %v1895 = vadd.f32 %v1799, %v1894
    %v1896 = vpop.f32.mrb[0].mxu0
    %1897 = vmatprep.mubr.bf16.mxu0 0
    %1898 = vmatmul.mubr.bf16.gmra.mrb[0].mxu0 %v1775
    %v1899 = vpop.f32.mrb[0].mxu0
    %v1900 = vadd.f32 %v1799, %v1899
    %v1901 = vpop.f32.mrb[0].mxu0
    %v1902 = vpop.f32.mrb[0].mxu0
    %v1903 = vadd.f32 %v1799, %v1902
    %v1904 = vpop.f32.mrb[0].mxu0
    %1905 = vmatprep.mubr.bf16.mxu0 0
    %1906 = vmatmul.mubr.bf16.gmra.mrb[0].mxu0 %v1776
    %v1907 = vpop.f32.mrb[0].mxu0
    %v1908 = vadd.f32 %v1799, %v1907
    %v1909 = vpop.f32.mrb[0].mxu0
    %v1910 = vpop.f32.mrb[0].mxu0
    %v1911 = vadd.f32 %v1799, %v1910
    %v1912 = vpop.f32.mrb[0].mxu0
    %1913 = vmatprep.mubr.bf16.mxu0 0
    %1914 = vmatmul.mubr.bf16.gmra.mrb[0].mxu0 %v1777
    %v1915 = vpop.f32.mrb[0].mxu0
    %v1916 = vadd.f32 %v1799, %v1915
    %v1917 = vpop.f32.mrb[0].mxu0
    %v1918 = vpop.f32.mrb[0].mxu0
    %v1919 = vpop.f32.mrb[0].mxu0
    %1920 = vdwg.mxu0
    %1921 = vst [vmem:[#allocation12] sm:$0xff] %v1884
    %1922 = vst [vmem:[#allocation12 + $0x8] sm:$0xff] %v1887
    %1923 = vst [vmem:[#allocation12 + $0x10] sm:$0xff] %v1892
    %1924 = vst [vmem:[#allocation12 + $0x18] sm:$0xff] %v1895
    %1925 = vst [vmem:[#allocation12 + $0x20] sm:$0xff] %v1900
    %1926 = vst [vmem:[#allocation12 + $0x28] sm:$0xff] %v1903
    %1927 = vst [vmem:[#allocation12 + $0x30] sm:$0xff] %v1908
    %1928 = vst [vmem:[#allocation12 + $0x38] sm:$0xff] %v1911
    %1929 = vst [vmem:[#allocation12 + $0x40] sm:$0xff] %v1916
    // Predicated region
    $region42: #{tpu_custom_call.1} parent=1 // pred_check
      _
    $region43: #{tpu_custom_call.1} parent=1 // pred_check_branch
      %1931 = sbr.rel (0) target = $region45
    $region44: #{tpu_custom_call.1} parent=1 // pred_region
      %s1933 = ssub.s32 1152, 1152
      %1934 = vsyncadd [#allocation6], %s1933
      %s1935 = sshll.u32 [#allocation12], 4
      %s1936 = int_to_ptr.vmem [resolvable:$true] %s1935
      %1941 = dma.vmem_to_hbm [thread:$0]  %s1936, 1152, %s6, [#allocation6], 128, 128, 8
    $region45: #{tpu_custom_call.1} parent=1 // pred_fallthru
      _
    // Predicated region
    $region46: #{tpu_custom_call.1} parent=1 // pred_check
      _
    $region47: #{tpu_custom_call.1} parent=1 // pred_check_branch
      %1943 = sbr.rel (0) target = $region49
    $region48: #{tpu_custom_call.1} parent=1 // pred_region
      %1944 = dma.done [#allocation6], 1152
    $region49: #{tpu_custom_call.1} parent=1 // pred_fallthru
      _
    %1945 = vsyncpa [#allocation5], 1
    %1946 = vsyncpa [#allocation8], 1
    %1947 = vsyncpa [#allocation11], 1
    %1948 = vsyncpa [#allocation6], 1

</llo_original>
